<compile_context>
chip_gen: v7x
topology: tpu7x:2x2x1
jax: 0.10.0
libtpu: 0.0.40
codegen_flags: <defaults>
</compile_context>

<pallas_src>
import math
import random
from functools import partial

import jax
import jax.numpy as jnp
from jax.experimental import pallas as pl
from jax.experimental.pallas import tpu as pltpu


def _round_up(x, m):
    return (x + m - 1) // m * m


# ----------------------------- Pallas kernel ------------------------------ #

def _fir_band_matmul_kernel(xa_ref, xb_ref, ba_ref, bb_ref, o_ref):
    """One output tile of the FIR filter as two banded-Toeplitz MXU matmuls.

    xa_ref: (R_tile, T_tile)   padded-input time block i   (aligned with output)
    xb_ref: (R_tile, T_tile)   padded-input time block i+1 (right halo, K-1 <= T_tile)
    ba_ref: (T_tile, T_tile)   band rows [0, T_tile)           (VMEM-resident)
    bb_ref: (T_tile, T_tile)   band rows [T_tile, 2*T_tile)    (VMEM-resident)
    o_ref : (R_tile, T_tile)   output tile (lane-dense: T_tile % 128 == 0)
    """
    acc = jnp.dot(xa_ref[...], ba_ref[...], preferred_element_type=jnp.float32)
    acc = acc + jnp.dot(xb_ref[...], bb_ref[...], preferred_element_type=jnp.float32)
    o_ref[...] = acc.astype(o_ref.dtype)


def _band_matrices(taps, t_tile, dtype):
    """Banded Toeplitz matrices: band[j, t] = taps[j - t] for 0 <= j - t < K."""
    k = taps.shape[0]
    j = jnp.arange(2 * t_tile, dtype=jnp.int32)[:, None]
    t = jnp.arange(t_tile, dtype=jnp.int32)[None, :]
    d = j - t
    band = jnp.where((d >= 0) & (d < k), taps[jnp.clip(d, 0, k - 1)], 0.0)
    band = band.astype(dtype)
    return band[:t_tile], band[t_tile:]


@partial(jax.jit, static_argnames=("compute_dtype",))
def fir_filter_same(x, taps, *, compute_dtype=None):
    """Odd-length FIR filter with 'same' zero padding along the last axis.

    x: (B, C, T);  taps: (K,) float32, K odd.  Matches per-row
    F.conv1d(x, taps, padding=(K-1)//2)  (cross-correlation).
    compute_dtype: set to jnp.bfloat16 on v6e/v7x for bf16 MXU inputs with
    f32 accumulation; default keeps the input dtype (f32, safest on v5e).
    """
    B, C, T = x.shape
    K = int(taps.shape[0])
    half = (K - 1) // 2
    R = B * C

    # Time tile must cover the K-1 halo so an output tile only needs input
    # blocks i and i+1; keep it a multiple of 128 (lane-dense output stores).
    T_tile = max(512, _round_up(max(K - 1, 1), 128))
    Rp = _round_up(R, 8)
    R_tile = min(Rp, 128)
    Rp = _round_up(Rp, R_tile)
    n_t = pl.cdiv(T, T_tile)
    n_r = Rp // R_tile

    cdt = x.dtype if compute_dtype is None else compute_dtype

    # Natural (R, T) layout — no host transposes.  One zero-pad pass:
    # `half` on the left ('same' padding) and out to (n_t + 1) time blocks so
    # the shifted "block i + 1" halo always exists.
    xr = x.reshape(R, T)
    t_padded = (n_t + 1) * T_tile
    xpad = jnp.pad(xr, ((0, Rp - R), (half, t_padded - half - T))).astype(cdt)

    band_a, band_b = _band_matrices(taps, T_tile, cdt)

    out = pl.pallas_call(
        _fir_band_matmul_kernel,
        out_shape=jax.ShapeDtypeStruct((Rp, n_t * T_tile), x.dtype),
        grid_spec=pltpu.PrefetchScalarGridSpec(
            num_scalar_prefetch=0,
            grid=(n_r, n_t),
            in_specs=[
                pl.BlockSpec((R_tile, T_tile), lambda r, t: (r, t)),      # block i
                pl.BlockSpec((R_tile, T_tile), lambda r, t: (r, t + 1)),  # halo block
                pl.BlockSpec((T_tile, T_tile), lambda r, t: (0, 0)),      # band_a (resident)
                pl.BlockSpec((T_tile, T_tile), lambda r, t: (0, 0)),      # band_b (resident)
            ],
            out_specs=pl.BlockSpec((R_tile, T_tile), lambda r, t: (r, t)),
        ),
        compiler_params=pltpu.CompilerParams(
            dimension_semantics=("parallel", "parallel"),
        ),
    )(xpad, xpad, band_a, band_b)

    return out[:R, :T].reshape(B, C, T)


# ------------------------ julius-style filter taps ------------------------ #

def _sinc(x):
    safe = jnp.where(x == 0, 1.0, x)
    return jnp.where(x == 0, 1.0, jnp.sin(safe) / safe)


def lowpass_taps(cutoff, zeros=8):
    """Windowed-sinc lowpass FIR taps, as julius.lowpass.LowPassFilters."""
    half_size = int(zeros / cutoff / 2)
    n = 2 * half_size + 1
    # torch.hann_window(n, periodic=False)
    window = 0.5 - 0.5 * jnp.cos(
        2.0 * jnp.pi * jnp.arange(n, dtype=jnp.float32) / (n - 1))
    t = jnp.arange(-half_size, half_size + 1, dtype=jnp.float32)
    filt = 2.0 * cutoff * window * _sinc(2.0 * cutoff * math.pi * t)
    filt = filt / jnp.sum(filt)
    return filt.astype(jnp.float32)


def highpass_taps(cutoff, zeros=8):
    """highpass(x) = x - lowpass(x)  ->  taps = delta - lowpass_taps."""
    low = lowpass_taps(cutoff, zeros)
    half_size = (low.shape[0] - 1) // 2
    delta = jnp.zeros_like(low).at[half_size].set(1.0)
    return (delta - low).astype(jnp.float32)


# ------------------------------- the module -------------------------------- #

class HighLowPass:
    def __init__(self, sample_rate, lowpass_freq_low=2200, lowpass_freq_high=4000,
                 highpass_freq_low=200, highpass_freq_high=1200, seed=0):
        self.sample_rate = sample_rate
        self.lowpass_freq_low = lowpass_freq_low
        self.lowpass_freq_high = lowpass_freq_high
        self.highpass_freq_low = highpass_freq_low
        self.highpass_freq_high = highpass_freq_high
        # deterministic stand-in for the module's Python `random` calls
        self._rng = random.Random(seed)

    def __call__(self, audio, compute_dtype=None):
        highlowband = self._rng.randint(0, 1)
        if highlowband == 0:
            freq = self._rng.randint(self.highpass_freq_low, self.highpass_freq_high)
            taps = highpass_taps(freq / self.sample_rate)
        else:
            freq = self._rng.randint(self.lowpass_freq_low, self.lowpass_freq_high)
            taps = lowpass_taps(freq / self.sample_rate)
        return fir_filter_same(audio, taps, compute_dtype=compute_dtype)


# --------------------------------- main ------------------------------------ #

if __name__ == "__main__":
    sample_rate = 16000
    key = jax.random.PRNGKey(0)
    audio = jax.random.normal(key, (2, 4, 1024), dtype=jnp.float32)  # (B, C, T)

    op = HighLowPass(sample_rate, seed=0)
    out = op(audio)
    out = jax.block_until_ready(out)
    assert out.shape == audio.shape and out.dtype == audio.dtype

    # Pure-JAX reference: replay the same seeded random choices, convolve.
    rng = random.Random(0)
    if rng.randint(0, 1) == 0:
        taps = highpass_taps(rng.randint(200, 1200) / sample_rate)
    else:
        taps = lowpass_taps(rng.randint(2200, 4000) / sample_rate)
    # Taps are symmetric -> convolve == correlate; 'same' matches conv1d padding.
    ref = jax.vmap(
        lambda r: jnp.convolve(r, taps, mode="same",
                               precision=jax.lax.Precision.HIGHEST)
    )(audio.reshape(-1, audio.shape[-1])).reshape(audio.shape)
    err = float(jnp.max(jnp.abs(out - ref)))
    # Tolerance leaves headroom for MXU f32 pass structure vs XLA's conv path.
    assert jnp.allclose(out, ref, atol=2e-3, rtol=2e-3), f"max abs err = {err}"

    print("KERNEL_OK")
</pallas_src>

<mosaic_0001>
module attributes {stable_mosaic.version = 11 : i64} {
  func.func @_fir_band_matmul_kernel(%arg0: i32, %arg1: i32, %arg2: memref<8x512xf32, #tpu.memory_space<vmem>>, %arg3: memref<8x512xf32, #tpu.memory_space<vmem>>, %arg4: memref<512x512xf32, #tpu.memory_space<vmem>>, %arg5: memref<512x512xf32, #tpu.memory_space<vmem>>, %arg6: memref<8x512xf32, #tpu.memory_space<vmem>>) attributes {dimension_semantics = [#tpu.dimension_semantics<parallel>, #tpu.dimension_semantics<parallel>], iteration_bounds = array<i64: 1, 2>, scalar_prefetch = 0 : i64, scratch_operands = 0 : i64, tpu.core_type = #tpu.core_type<tc>, window_params = [{transform_indices = @transform_0, window_bounds = array<i64: 8, 512>}, {transform_indices = @transform_1, window_bounds = array<i64: 8, 512>}, {pipeline_mode = #tpu.pipeline_mode<synchronous>, transform_indices = @transform_2, window_bounds = array<i64: 512, 512>}, {pipeline_mode = #tpu.pipeline_mode<synchronous>, transform_indices = @transform_3, window_bounds = array<i64: 512, 512>}, {transform_indices = @transform_4, window_bounds = array<i64: 8, 512>}]} {
    %c0 = arith.constant 0 : index
    %c0_0 = arith.constant 0 : index
    %0 = vector.load %arg2[%c0, %c0_0] : memref<8x512xf32, #tpu.memory_space<vmem>>, vector<8x512xf32>
    %c0_1 = arith.constant 0 : index
    %c0_2 = arith.constant 0 : index
    %1 = vector.load %arg4[%c0_1, %c0_2] : memref<512x512xf32, #tpu.memory_space<vmem>>, vector<512x512xf32>
    %cst = arith.constant dense<0.000000e+00> : vector<8x512xf32>
    %2 = tpu.matmul %0, %1, %cst {dimension_numbers = #tpu.dot_dimension_numbers<[1], [0], [0], [1], [0, 0, 1, 1], [], []>} : vector<8x512xf32>, vector<512x512xf32>, vector<8x512xf32> -> vector<8x512xf32>
    %c0_3 = arith.constant 0 : index
    %c0_4 = arith.constant 0 : index
    %3 = vector.load %arg3[%c0_3, %c0_4] : memref<8x512xf32, #tpu.memory_space<vmem>>, vector<8x512xf32>
    %c0_5 = arith.constant 0 : index
    %c0_6 = arith.constant 0 : index
    %4 = vector.load %arg5[%c0_5, %c0_6] : memref<512x512xf32, #tpu.memory_space<vmem>>, vector<512x512xf32>
    %cst_7 = arith.constant dense<0.000000e+00> : vector<8x512xf32>
    %5 = tpu.matmul %3, %4, %cst_7 {dimension_numbers = #tpu.dot_dimension_numbers<[1], [0], [0], [1], [0, 0, 1, 1], [], []>} : vector<8x512xf32>, vector<512x512xf32>, vector<8x512xf32> -> vector<8x512xf32>
    %6 = arith.addf %2, %5 : vector<8x512xf32>
    %c0_8 = arith.constant 0 : index
    %c0_9 = arith.constant 0 : index
    %7 = vector.load %arg6[%c0_8, %c0_9] : memref<8x512xf32, #tpu.memory_space<vmem>>, vector<8x512xf32>
    tpu.vector_store %arg6[%c0_8, %c0_9], %6 {strides = array<i32>} : memref<8x512xf32, #tpu.memory_space<vmem>>, vector<8x512xf32>,
    return
  }
  func.func @transform_0(%arg0: i32, %arg1: i32) -> (i32, i32) {
    %c0_i32 = arith.constant 0 : i32
    return %arg0, %arg1 : i32, i32
  }
  func.func @transform_1(%arg0: i32, %arg1: i32) -> (i32, i32) {
    %c1_i32 = arith.constant 1 : i32
    %0 = arith.addi %arg1, %c1_i32 : i32
    %c0_i32 = arith.constant 0 : i32
    return %arg0, %0 : i32, i32
  }
  func.func @transform_2(%arg0: i32, %arg1: i32) -> (i32, i32) {
    %c0_i32 = arith.constant 0 : i32
    %c0_i32_0 = arith.constant 0 : i32
    %c0_i32_1 = arith.constant 0 : i32
    return %c0_i32, %c0_i32_0 : i32, i32
  }
  func.func @transform_3(%arg0: i32, %arg1: i32) -> (i32, i32) {
    %c0_i32 = arith.constant 0 : i32
    %c0_i32_0 = arith.constant 0 : i32
    %c0_i32_1 = arith.constant 0 : i32
    return %c0_i32, %c0_i32_0 : i32, i32
  }
  func.func @transform_4(%arg0: i32, %arg1: i32) -> (i32, i32) {
    %c0_i32 = arith.constant 0 : i32
    return %arg0, %arg1 : i32, i32
  }
}

</mosaic_0001>

<llo_original>
// kernel: fir_filter_same.1
$region0: #{fir_filter_same.1}
  #allocation0 [shape = 'u32[]', space=smem, size = 0x4, offset = 0x4, fixed_abs, tag = 'smem constant byte address 0x4 - core index']
  #allocation1 [shape = 'u32[144,128]{1,0:T(1,128)}', space=vmem, size = 0x12000, scoped, tag = 'internal scratch']
  %s0 = inlined_call_operand.vmem [shape: f32[8,1536], index: 0, kind: input, shape index: {}, may-alias: {0,1}]
  %s1 = inlined_call_operand.vmem [shape: f32[8,1536], index: 1, kind: input, shape index: {}, may-alias: {0,1}]
  %s2 = inlined_call_operand.vmem [shape: f32[512,512], index: 2, kind: input, shape index: {}]
  %s3 = inlined_call_operand.vmem [shape: f32[512,512], index: 3, kind: input, shape index: {}]
  %s4 = inlined_call_operand.vmem [shape: f32[8,1024], index: 4, kind: output, shape index: {}]
  %s5 = sld [smem:[#allocation0]]
  $region49: #{fir_filter_same.1} parent=0
    _
  %s7 = ssub.s32 1, %s5
  %s8 = scalar_select 0, %s7, %s5
  loop: start=0, step=1, limit=4
  $region2: #{fir_filter_same.1} parent=0 // loop_pre_header
    _
  $region3: #{fir_filter_same.1} parent=0 // loop_header
    %s10 = sphi 0, %s14
    %p11 = scmp.ge.s32.totalorder %s10, 4
    %s17 = sphi 0, %s29
    %s18 = sphi 0, %s25
    %s19 = sphi 0, %s17
    %s20 = sphi 0, %s18
    %s21 = sphi 0, %s19
    %s22 = sphi 0, %s20
    %s34 = sphi 0, %s36
    %s37 = sphi 0, %s34
    %s38 = sphi 0, %s37
    %s54 = sphi 0, %s38
    %s64 = sphi 0, %s66
    %s67 = sphi 0, %s64
    %s68 = sphi 0, %s67
    %s84 = sphi 0, %s68
    %s88 = sphi 0, %s88
    %s90 = sphi 0, %s88
    %s91 = sphi 0, %s90
    %s105 = sphi 0, %s91
    %s109 = sphi 0, %s109
    %s111 = sphi 0, %s109
    %s112 = sphi 0, %s111
    %s126 = sphi 0, %s112
    %s134 = sphi 0, %s136
    %s137 = sphi 0, %s134
    %s138 = sphi 0, %s137
    %s154 = sphi 0, %s138
  $region4: #{fir_filter_same.1} parent=0 // loop_header_branch
    %13 = sbr.rel (%p11) target = $region8
  $region5: #{fir_filter_same.1} parent=0 // loop_body
    %s15 = ssub.s32 %s10, 1
    %s16 = ssub.s32 %s10, 2
    %s23 = sadd.s32 1, %s18
    %p24 = scmp.ge.s32.totalorder %s23, 2
    %s25 = scalar_select %p24, 0, %s23
    %s26 = sadd.s32 1, %s17
    %s27 = scalar_select %p24, %s26, %s17
    %p28 = scmp.ge.s32.totalorder %s27, 1
    %s29 = scalar_select %p28, 0, %s27
    %s30 = ssub.s32 %s17, %s29
    %s31 = ssub.s32 %s18, %s25
    %s32 = sor.u32 %s30, %s31
    %p33 = scmp.eq.s32.totalorder %s32, 0
    %s35 = sadd.s32 %s34, 1
    %s36 = scalar_select %p33, %s34, %s35
    %p39 = pneg %p33
    %p40 = scmp.eq.s32.totalorder %s10, 1
    %p41 = por %p39, %p40
    %p42 = scmp.ne.s32.totalorder %s34, %s37
    %p43 = scmp.eq.s32.totalorder %s10, 0
    %p44 = por %p42, %p43
    %p45 = scmp.ne.s32.totalorder %s34, %s37
    %p46 = scmp.eq.s32.totalorder %s15, 1
    %p47 = por %p45, %p46
    %p48 = scmp.ne.s32.totalorder %s37, %s38
    %p49 = scmp.eq.s32.totalorder %s15, 0
    %p50 = por %p48, %p49
    %p51 = scmp.ne.s32.totalorder %s37, %s38
    %p52 = scmp.eq.s32.totalorder %s16, 1
    %p53 = por %p51, %p52
    %p55 = scmp.ne.s32.totalorder %s38, %s54
    %p56 = scmp.eq.s32.totalorder %s16, 0
    %p57 = por %p55, %p56
    %s58 = sadd.s32 %s18, 1
    %s59 = sadd.s32 %s25, 1
    %s60 = ssub.s32 %s17, %s29
    %s61 = ssub.s32 %s58, %s59
    %s62 = sor.u32 %s60, %s61
    %p63 = scmp.eq.s32.totalorder %s62, 0
    %s65 = sadd.s32 %s64, 1
    %s66 = scalar_select %p63, %s64, %s65
    %p69 = pneg %p63
    %p70 = scmp.eq.s32.totalorder %s10, 1
    %p71 = por %p69, %p70
    %p72 = scmp.ne.s32.totalorder %s64, %s67
    %p73 = scmp.eq.s32.totalorder %s10, 0
    %p74 = por %p72, %p73
    %p75 = scmp.ne.s32.totalorder %s64, %s67
    %p76 = scmp.eq.s32.totalorder %s15, 1
    %p77 = por %p75, %p76
    %p78 = scmp.ne.s32.totalorder %s67, %s68
    %p79 = scmp.eq.s32.totalorder %s15, 0
    %p80 = por %p78, %p79
    %p81 = scmp.ne.s32.totalorder %s67, %s68
    %p82 = scmp.eq.s32.totalorder %s16, 1
    %p83 = por %p81, %p82
    %p85 = scmp.ne.s32.totalorder %s68, %s84
    %p86 = scmp.eq.s32.totalorder %s16, 0
    %p87 = por %p85, %p86
    %s89 = sadd.s32 %s88, 1
    %p92 = scmp.eq.s32.totalorder %s10, 1
    %p93 = scmp.ne.s32.totalorder %s88, %s90
    %p94 = scmp.eq.s32.totalorder %s10, 0
    %p95 = por %p93, %p94
    %p96 = scmp.ne.s32.totalorder %s88, %s90
    %p97 = scmp.eq.s32.totalorder %s15, 1
    %p98 = por %p96, %p97
    %p99 = scmp.ne.s32.totalorder %s90, %s91
    %p100 = scmp.eq.s32.totalorder %s15, 0
    %p101 = por %p99, %p100
    %p102 = scmp.ne.s32.totalorder %s90, %s91
    %p103 = scmp.eq.s32.totalorder %s16, 1
    %p104 = por %p102, %p103
    %p106 = scmp.ne.s32.totalorder %s91, %s105
    %p107 = scmp.eq.s32.totalorder %s16, 0
    %p108 = por %p106, %p107
    %s110 = sadd.s32 %s109, 1
    %p113 = scmp.eq.s32.totalorder %s10, 1
    %p114 = scmp.ne.s32.totalorder %s109, %s111
    %p115 = scmp.eq.s32.totalorder %s10, 0
    %p116 = por %p114, %p115
    %p117 = scmp.ne.s32.totalorder %s109, %s111
    %p118 = scmp.eq.s32.totalorder %s15, 1
    %p119 = por %p117, %p118
    %p120 = scmp.ne.s32.totalorder %s111, %s112
    %p121 = scmp.eq.s32.totalorder %s15, 0
    %p122 = por %p120, %p121
    %p123 = scmp.ne.s32.totalorder %s111, %s112
    %p124 = scmp.eq.s32.totalorder %s16, 1
    %p125 = por %p123, %p124
    %p127 = scmp.ne.s32.totalorder %s112, %s126
    %p128 = scmp.eq.s32.totalorder %s16, 0
    %p129 = por %p127, %p128
    %s130 = ssub.s32 %s17, %s29
    %s131 = ssub.s32 %s18, %s25
    %s132 = sor.u32 %s130, %s131
    %p133 = scmp.eq.s32.totalorder %s132, 0
    %s135 = sadd.s32 %s134, 1
    %s136 = scalar_select %p133, %s134, %s135
    %p139 = pneg %p133
    %p140 = scmp.eq.s32.totalorder %s10, 1
    %p141 = por %p139, %p140
    %p142 = scmp.ne.s32.totalorder %s134, %s137
    %p143 = scmp.eq.s32.totalorder %s10, 0
    %p144 = por %p142, %p143
    %p145 = scmp.ne.s32.totalorder %s134, %s137
    %p146 = scmp.eq.s32.totalorder %s15, 1
    %p147 = por %p145, %p146
    %p148 = scmp.ne.s32.totalorder %s137, %s138
    %p149 = scmp.eq.s32.totalorder %s15, 0
    %p150 = por %p148, %p149
    %p151 = scmp.ne.s32.totalorder %s137, %s138
    %p152 = scmp.eq.s32.totalorder %s16, 1
    %p153 = por %p151, %p152
    %p155 = scmp.ne.s32.totalorder %s138, %s154
    %p156 = scmp.eq.s32.totalorder %s16, 0
    %p157 = por %p155, %p156
    %p158 = scmp.le.s32.totalorder 1, %s10
    %p159 = scmp.lt.s32.totalorder %s10, 3
    %p160 = pnand %p158, %p159
    %p161 = pneg %p160
    // Predicated region
    $region9: #{fir_filter_same.1} parent=5 // pred_check
      _
    $region10: #{fir_filter_same.1} parent=5 // pred_check_branch
      %163 = sbr.rel (%p160) target = $region12
    $region11: #{fir_filter_same.1} parent=5 // pred_region
      %s164 = ssub.s32 %s10, 1
      // Predicated region
      $region13: #{fir_filter_same.1} parent=11 // pred_check
        %p165 = pneg %p101
      $region14: #{fir_filter_same.1} parent=11 // pred_check_branch
        %167 = sbr.rel (%p165) target = $region16
      $region15: #{fir_filter_same.1} parent=11 // pred_region
        _
      $region16: #{fir_filter_same.1} parent=11 // pred_fallthru
        _
      // Predicated region
      $region17: #{fir_filter_same.1} parent=11 // pred_check
        %p168 = pneg %p122
      $region18: #{fir_filter_same.1} parent=11 // pred_check_branch
        %170 = sbr.rel (%p168) target = $region20
      $region19: #{fir_filter_same.1} parent=11 // pred_region
        _
      $region20: #{fir_filter_same.1} parent=11 // pred_fallthru
        _
    $region12: #{fir_filter_same.1} parent=5 // pred_fallthru
      _
    %p171 = scmp.lt.s32.totalorder %s10, 2
    // Predicated region
    $region21: #{fir_filter_same.1} parent=5 // pred_check
      %p172 = pneg %p171
    $region22: #{fir_filter_same.1} parent=5 // pred_check_branch
      %174 = sbr.rel (%p172) target = $region24
    $region23: #{fir_filter_same.1} parent=5 // pred_region
      // Predicated region
      $region25: #{fir_filter_same.1} parent=23 // pred_check
        %p175 = pneg %p44
      $region26: #{fir_filter_same.1} parent=23 // pred_check_branch
        %177 = sbr.rel (%p175) target = $region28
      $region27: #{fir_filter_same.1} parent=23 // pred_region
        %s178 = smul.u32 4, %s18
        %p179 = scmp.lt.s32.totalorder %s17, 0
        %s180 = scalar_select %p179, %s17, 0
        %p181 = scmp.lt.s32.totalorder %s178, 11
        %s182 = scalar_select %p181, %s178, 11
        %s183 = smul.addr %s180, 12
        %s184 = sadd.s32 %s182, %s183
        %s185 = smul.addr %s184, 8
        %s186 = scalar_lea.vmem %s0, %s185
        %s187 = smul.u32 4, %s18
      $region28: #{fir_filter_same.1} parent=23 // pred_fallthru
        _
      // Predicated region
      $region29: #{fir_filter_same.1} parent=23 // pred_check
        %p188 = pneg %p74
      $region30: #{fir_filter_same.1} parent=23 // pred_check_branch
        %190 = sbr.rel (%p188) target = $region32
      $region31: #{fir_filter_same.1} parent=23 // pred_region
        %s191 = sadd.s32 %s18, 1
        %s192 = smul.u32 4, %s191
        %p193 = scmp.lt.s32.totalorder %s17, 0
        %s194 = scalar_select %p193, %s17, 0
        %p195 = scmp.lt.s32.totalorder %s192, 11
        %s196 = scalar_select %p195, %s192, 11
        %s197 = smul.addr %s194, 12
        %s198 = sadd.s32 %s196, %s197
        %s199 = smul.addr %s198, 8
        %s200 = scalar_lea.vmem %s1, %s199
        %s201 = sadd.s32 %s18, 1
        %s202 = smul.u32 4, %s201
      $region32: #{fir_filter_same.1} parent=23 // pred_fallthru
        _
    $region24: #{fir_filter_same.1} parent=5 // pred_fallthru
      _
    %p203 = scmp.le.s32.totalorder 1, %s10
    %p204 = scmp.lt.s32.totalorder %s10, 3
    %p205 = pnand %p203, %p204
    %p206 = pneg %p205
    // Predicated region
    $region33: #{fir_filter_same.1} parent=5 // pred_check
      _
    $region34: #{fir_filter_same.1} parent=5 // pred_check_branch
      %208 = sbr.rel (%p205) target = $region36
    $region35: #{fir_filter_same.1} parent=5 // pred_region
      %s209 = ssub.s32 %s10, 1
      %s210 = smul.u32 4, %s20
      %p211 = scmp.lt.s32.totalorder %s19, 0
      %s212 = scalar_select %p211, %s19, 0
      %p213 = scmp.lt.s32.totalorder %s210, 11
      %s214 = scalar_select %p213, %s210, 11
      %s215 = smul.addr %s212, 12
      %s216 = sadd.s32 %s214, %s215
      %s217 = smul.addr %s216, 8
      %s218 = scalar_lea.vmem %s0, %s217
      %p219 = pneg %p50
      %p220 = pneg %p47
      %s221 = sadd.s32 %s20, 1
      %s222 = smul.u32 4, %s221
      %p223 = scmp.lt.s32.totalorder %s19, 0
      %s224 = scalar_select %p223, %s19, 0
      %p225 = scmp.lt.s32.totalorder %s222, 11
      %s226 = scalar_select %p225, %s222, 11
      %s227 = smul.addr %s224, 12
      %s228 = sadd.s32 %s226, %s227
      %s229 = smul.addr %s228, 8
      %s230 = scalar_lea.vmem %s1, %s229
      %p231 = pneg %p80
      %p232 = pneg %p77
      %p233 = pneg %p101
      %p234 = pneg %p98
      %p235 = pneg %p122
      %p236 = pneg %p119
      %p237 = pneg %p150
      %p238 = pneg %p147
      %s239 = smul.u32 4, %s20
      %p240 = scmp.lt.s32.totalorder %s19, 0
      %s241 = scalar_select %p240, %s19, 0
      %p242 = scmp.lt.s32.totalorder %s239, 7
      %s243 = scalar_select %p242, %s239, 7
      %s244 = smul.addr %s241, 8
      %s245 = sadd.s32 %s243, %s244
      %s246 = smul.addr %s245, 8
      %s247 = scalar_lea.vmem %s4, %s246
      %s248 = smul.u32 4, %s20
      %p249 = scmp.lt.s32.totalorder %s19, 0
      %s250 = scalar_select %p249, %s19, 0
      %p251 = scmp.lt.s32.totalorder %s248, 11
      %s252 = scalar_select %p251, %s248, 11
      %s253 = smul.addr %s250, 12
      %s254 = sadd.s32 %s252, %s253
      %s255 = smul.addr %s254, 8
      %s256 = scalar_lea.vmem %s0, %s255
      %s257 = smul.u32 4, %s20
      %s258 = sadd.s32 %s20, 1
      %s259 = smul.u32 4, %s258
      %p260 = scmp.lt.s32.totalorder %s19, 0
      %s261 = scalar_select %p260, %s19, 0
      %p262 = scmp.lt.s32.totalorder %s259, 11
      %s263 = scalar_select %p262, %s259, 11
      %s264 = smul.addr %s261, 12
      %s265 = sadd.s32 %s263, %s264
      %s266 = smul.addr %s265, 8
      %s267 = scalar_lea.vmem %s1, %s266
      %s268 = sadd.s32 %s20, 1
      %s269 = smul.u32 4, %s268
      %s270 = smul.u32 4, %s20
      %p271 = scmp.lt.s32.totalorder %s19, 0
      %s272 = scalar_select %p271, %s19, 0
      %p273 = scmp.lt.s32.totalorder %s270, 7
      %s274 = scalar_select %p273, %s270, 7
      %s275 = smul.addr %s272, 8
      %s276 = sadd.s32 %s274, %s275
      %s277 = smul.addr %s276, 8
      %s278 = scalar_lea.vmem %s4, %s277
      %s279 = smul.u32 4, %s20
      %v280 = vld [vmem:[%s256] sm:$0xff]
      %v281 = vld [vmem:[%s256 + $0x8] sm:$0xff]
      %v282 = vld [vmem:[%s256 + $0x10] sm:$0xff]
      %v283 = vld [vmem:[%s256 + $0x18] sm:$0xff]
      %v284 = vld [vmem:[%s2] sm:$0xff]
      %v285 = vld [vmem:[%s2 + $0x8] sm:$0xff]
      %v286 = vld [vmem:[%s2 + $0x10] sm:$0xff]
      %v287 = vld [vmem:[%s2 + $0x18] sm:$0xff]
      %v288 = vld [vmem:[%s2 + $0x20] sm:$0xff]
      %v289 = vld [vmem:[%s2 + $0x28] sm:$0xff]
      %v290 = vld [vmem:[%s2 + $0x30] sm:$0xff]
      %v291 = vld [vmem:[%s2 + $0x38] sm:$0xff]
      %v292 = vld [vmem:[%s2 + $0x40] sm:$0xff]
      %v293 = vld [vmem:[%s2 + $0x48] sm:$0xff]
      %v294 = vld [vmem:[%s2 + $0x50] sm:$0xff]
      %v295 = vld [vmem:[%s2 + $0x58] sm:$0xff]
      %v296 = vld [vmem:[%s2 + $0x60] sm:$0xff]
      %v297 = vld [vmem:[%s2 + $0x68] sm:$0xff]
      %v298 = vld [vmem:[%s2 + $0x70] sm:$0xff]
      %v299 = vld [vmem:[%s2 + $0x78] sm:$0xff]
      %v300 = vld [vmem:[%s2 + $0x80] sm:$0xff]
      %v301 = vld [vmem:[%s2 + $0x88] sm:$0xff]
      %v302 = vld [vmem:[%s2 + $0x90] sm:$0xff]
      %v303 = vld [vmem:[%s2 + $0x98] sm:$0xff]
      %v304 = vld [vmem:[%s2 + $0xa0] sm:$0xff]
      %v305 = vld [vmem:[%s2 + $0xa8] sm:$0xff]
      %v306 = vld [vmem:[%s2 + $0xb0] sm:$0xff]
      %v307 = vld [vmem:[%s2 + $0xb8] sm:$0xff]
      %v308 = vld [vmem:[%s2 + $0xc0] sm:$0xff]
      %v309 = vld [vmem:[%s2 + $0xc8] sm:$0xff]
      %v310 = vld [vmem:[%s2 + $0xd0] sm:$0xff]
      %v311 = vld [vmem:[%s2 + $0xd8] sm:$0xff]
      %v312 = vld [vmem:[%s2 + $0xe0] sm:$0xff]
      %v313 = vld [vmem:[%s2 + $0xe8] sm:$0xff]
      %v314 = vld [vmem:[%s2 + $0xf0] sm:$0xff]
      %v315 = vld [vmem:[%s2 + $0xf8] sm:$0xff]
      %v316 = vld [vmem:[%s2 + $0x100] sm:$0xff]
      %v317 = vld [vmem:[%s2 + $0x108] sm:$0xff]
      %v318 = vld [vmem:[%s2 + $0x110] sm:$0xff]
      %v319 = vld [vmem:[%s2 + $0x118] sm:$0xff]
      %v320 = vld [vmem:[%s2 + $0x120] sm:$0xff]
      %v321 = vld [vmem:[%s2 + $0x128] sm:$0xff]
      %v322 = vld [vmem:[%s2 + $0x130] sm:$0xff]
      %v323 = vld [vmem:[%s2 + $0x138] sm:$0xff]
      %v324 = vld [vmem:[%s2 + $0x140] sm:$0xff]
      %v325 = vld [vmem:[%s2 + $0x148] sm:$0xff]
      %v326 = vld [vmem:[%s2 + $0x150] sm:$0xff]
      %v327 = vld [vmem:[%s2 + $0x158] sm:$0xff]
      %v328 = vld [vmem:[%s2 + $0x160] sm:$0xff]
      %v329 = vld [vmem:[%s2 + $0x168] sm:$0xff]
      %v330 = vld [vmem:[%s2 + $0x170] sm:$0xff]
      %v331 = vld [vmem:[%s2 + $0x178] sm:$0xff]
      %v332 = vld [vmem:[%s2 + $0x180] sm:$0xff]
      %v333 = vld [vmem:[%s2 + $0x188] sm:$0xff]
      %v334 = vld [vmem:[%s2 + $0x190] sm:$0xff]
      %v335 = vld [vmem:[%s2 + $0x198] sm:$0xff]
      %v336 = vld [vmem:[%s2 + $0x1a0] sm:$0xff]
      %v337 = vld [vmem:[%s2 + $0x1a8] sm:$0xff]
      %v338 = vld [vmem:[%s2 + $0x1b0] sm:$0xff]
      %v339 = vld [vmem:[%s2 + $0x1b8] sm:$0xff]
      %v340 = vld [vmem:[%s2 + $0x1c0] sm:$0xff]
      %v341 = vld [vmem:[%s2 + $0x1c8] sm:$0xff]
      %v342 = vld [vmem:[%s2 + $0x1d0] sm:$0xff]
      %v343 = vld [vmem:[%s2 + $0x1d8] sm:$0xff]
      %v344 = vld [vmem:[%s2 + $0x1e0] sm:$0xff]
      %v345 = vld [vmem:[%s2 + $0x1e8] sm:$0xff]
      %v346 = vld [vmem:[%s2 + $0x1f0] sm:$0xff]
      %v347 = vld [vmem:[%s2 + $0x1f8] sm:$0xff]
      %v348 = vld [vmem:[%s2 + $0x200] sm:$0xff]
      %v349 = vld [vmem:[%s2 + $0x208] sm:$0xff]
      %v350 = vld [vmem:[%s2 + $0x210] sm:$0xff]
      %v351 = vld [vmem:[%s2 + $0x218] sm:$0xff]
      %v352 = vld [vmem:[%s2 + $0x220] sm:$0xff]
      %v353 = vld [vmem:[%s2 + $0x228] sm:$0xff]
      %v354 = vld [vmem:[%s2 + $0x230] sm:$0xff]
      %v355 = vld [vmem:[%s2 + $0x238] sm:$0xff]
      %v356 = vld [vmem:[%s2 + $0x240] sm:$0xff]
      %v357 = vld [vmem:[%s2 + $0x248] sm:$0xff]
      %v358 = vld [vmem:[%s2 + $0x250] sm:$0xff]
      %v359 = vld [vmem:[%s2 + $0x258] sm:$0xff]
      %v360 = vld [vmem:[%s2 + $0x260] sm:$0xff]
      %v361 = vld [vmem:[%s2 + $0x268] sm:$0xff]
      %v362 = vld [vmem:[%s2 + $0x270] sm:$0xff]
      %v363 = vld [vmem:[%s2 + $0x278] sm:$0xff]
      %v364 = vld [vmem:[%s2 + $0x280] sm:$0xff]
      %v365 = vld [vmem:[%s2 + $0x288] sm:$0xff]
      %v366 = vld [vmem:[%s2 + $0x290] sm:$0xff]
      %v367 = vld [vmem:[%s2 + $0x298] sm:$0xff]
      %v368 = vld [vmem:[%s2 + $0x2a0] sm:$0xff]
      %v369 = vld [vmem:[%s2 + $0x2a8] sm:$0xff]
      %v370 = vld [vmem:[%s2 + $0x2b0] sm:$0xff]
      %v371 = vld [vmem:[%s2 + $0x2b8] sm:$0xff]
      %v372 = vld [vmem:[%s2 + $0x2c0] sm:$0xff]
      %v373 = vld [vmem:[%s2 + $0x2c8] sm:$0xff]
      %v374 = vld [vmem:[%s2 + $0x2d0] sm:$0xff]
      %v375 = vld [vmem:[%s2 + $0x2d8] sm:$0xff]
      %v376 = vld [vmem:[%s2 + $0x2e0] sm:$0xff]
      %v377 = vld [vmem:[%s2 + $0x2e8] sm:$0xff]
      %v378 = vld [vmem:[%s2 + $0x2f0] sm:$0xff]
      %v379 = vld [vmem:[%s2 + $0x2f8] sm:$0xff]
      %v380 = vld [vmem:[%s2 + $0x300] sm:$0xff]
      %v381 = vld [vmem:[%s2 + $0x308] sm:$0xff]
      %v382 = vld [vmem:[%s2 + $0x310] sm:$0xff]
      %v383 = vld [vmem:[%s2 + $0x318] sm:$0xff]
      %v384 = vld [vmem:[%s2 + $0x320] sm:$0xff]
      %v385 = vld [vmem:[%s2 + $0x328] sm:$0xff]
      %v386 = vld [vmem:[%s2 + $0x330] sm:$0xff]
      %v387 = vld [vmem:[%s2 + $0x338] sm:$0xff]
      %v388 = vld [vmem:[%s2 + $0x340] sm:$0xff]
      %v389 = vld [vmem:[%s2 + $0x348] sm:$0xff]
      %v390 = vld [vmem:[%s2 + $0x350] sm:$0xff]
      %v391 = vld [vmem:[%s2 + $0x358] sm:$0xff]
      %v392 = vld [vmem:[%s2 + $0x360] sm:$0xff]
      %v393 = vld [vmem:[%s2 + $0x368] sm:$0xff]
      %v394 = vld [vmem:[%s2 + $0x370] sm:$0xff]
      %v395 = vld [vmem:[%s2 + $0x378] sm:$0xff]
      %v396 = vld [vmem:[%s2 + $0x380] sm:$0xff]
      %v397 = vld [vmem:[%s2 + $0x388] sm:$0xff]
      %v398 = vld [vmem:[%s2 + $0x390] sm:$0xff]
      %v399 = vld [vmem:[%s2 + $0x398] sm:$0xff]
      %v400 = vld [vmem:[%s2 + $0x3a0] sm:$0xff]
      %v401 = vld [vmem:[%s2 + $0x3a8] sm:$0xff]
      %v402 = vld [vmem:[%s2 + $0x3b0] sm:$0xff]
      %v403 = vld [vmem:[%s2 + $0x3b8] sm:$0xff]
      %v404 = vld [vmem:[%s2 + $0x3c0] sm:$0xff]
      %v405 = vld [vmem:[%s2 + $0x3c8] sm:$0xff]
      %v406 = vld [vmem:[%s2 + $0x3d0] sm:$0xff]
      %v407 = vld [vmem:[%s2 + $0x3d8] sm:$0xff]
      %v408 = vld [vmem:[%s2 + $0x3e0] sm:$0xff]
      %v409 = vld [vmem:[%s2 + $0x3e8] sm:$0xff]
      %v410 = vld [vmem:[%s2 + $0x3f0] sm:$0xff]
      %v411 = vld [vmem:[%s2 + $0x3f8] sm:$0xff]
      %v412 = vld [vmem:[%s2 + $0x400] sm:$0xff]
      %v413 = vld [vmem:[%s2 + $0x408] sm:$0xff]
      %v414 = vld [vmem:[%s2 + $0x410] sm:$0xff]
      %v415 = vld [vmem:[%s2 + $0x418] sm:$0xff]
      %v416 = vld [vmem:[%s2 + $0x420] sm:$0xff]
      %v417 = vld [vmem:[%s2 + $0x428] sm:$0xff]
      %v418 = vld [vmem:[%s2 + $0x430] sm:$0xff]
      %v419 = vld [vmem:[%s2 + $0x438] sm:$0xff]
      %v420 = vld [vmem:[%s2 + $0x440] sm:$0xff]
      %v421 = vld [vmem:[%s2 + $0x448] sm:$0xff]
      %v422 = vld [vmem:[%s2 + $0x450] sm:$0xff]
      %v423 = vld [vmem:[%s2 + $0x458] sm:$0xff]
      %v424 = vld [vmem:[%s2 + $0x460] sm:$0xff]
      %v425 = vld [vmem:[%s2 + $0x468] sm:$0xff]
      %v426 = vld [vmem:[%s2 + $0x470] sm:$0xff]
      %v427 = vld [vmem:[%s2 + $0x478] sm:$0xff]
      %v428 = vld [vmem:[%s2 + $0x480] sm:$0xff]
      %v429 = vld [vmem:[%s2 + $0x488] sm:$0xff]
      %v430 = vld [vmem:[%s2 + $0x490] sm:$0xff]
      %v431 = vld [vmem:[%s2 + $0x498] sm:$0xff]
      %v432 = vld [vmem:[%s2 + $0x4a0] sm:$0xff]
      %v433 = vld [vmem:[%s2 + $0x4a8] sm:$0xff]
      %v434 = vld [vmem:[%s2 + $0x4b0] sm:$0xff]
      %v435 = vld [vmem:[%s2 + $0x4b8] sm:$0xff]
      %v436 = vld [vmem:[%s2 + $0x4c0] sm:$0xff]
      %v437 = vld [vmem:[%s2 + $0x4c8] sm:$0xff]
      %v438 = vld [vmem:[%s2 + $0x4d0] sm:$0xff]
      %v439 = vld [vmem:[%s2 + $0x4d8] sm:$0xff]
      %v440 = vld [vmem:[%s2 + $0x4e0] sm:$0xff]
      %v441 = vld [vmem:[%s2 + $0x4e8] sm:$0xff]
      %v442 = vld [vmem:[%s2 + $0x4f0] sm:$0xff]
      %v443 = vld [vmem:[%s2 + $0x4f8] sm:$0xff]
      %v444 = vld [vmem:[%s2 + $0x500] sm:$0xff]
      %v445 = vld [vmem:[%s2 + $0x508] sm:$0xff]
      %v446 = vld [vmem:[%s2 + $0x510] sm:$0xff]
      %v447 = vld [vmem:[%s2 + $0x518] sm:$0xff]
      %v448 = vld [vmem:[%s2 + $0x520] sm:$0xff]
      %v449 = vld [vmem:[%s2 + $0x528] sm:$0xff]
      %v450 = vld [vmem:[%s2 + $0x530] sm:$0xff]
      %v451 = vld [vmem:[%s2 + $0x538] sm:$0xff]
      %v452 = vld [vmem:[%s2 + $0x540] sm:$0xff]
      %v453 = vld [vmem:[%s2 + $0x548] sm:$0xff]
      %v454 = vld [vmem:[%s2 + $0x550] sm:$0xff]
      %v455 = vld [vmem:[%s2 + $0x558] sm:$0xff]
      %v456 = vld [vmem:[%s2 + $0x560] sm:$0xff]
      %v457 = vld [vmem:[%s2 + $0x568] sm:$0xff]
      %v458 = vld [vmem:[%s2 + $0x570] sm:$0xff]
      %v459 = vld [vmem:[%s2 + $0x578] sm:$0xff]
      %v460 = vld [vmem:[%s2 + $0x580] sm:$0xff]
      %v461 = vld [vmem:[%s2 + $0x588] sm:$0xff]
      %v462 = vld [vmem:[%s2 + $0x590] sm:$0xff]
      %v463 = vld [vmem:[%s2 + $0x598] sm:$0xff]
      %v464 = vld [vmem:[%s2 + $0x5a0] sm:$0xff]
      %v465 = vld [vmem:[%s2 + $0x5a8] sm:$0xff]
      %v466 = vld [vmem:[%s2 + $0x5b0] sm:$0xff]
      %v467 = vld [vmem:[%s2 + $0x5b8] sm:$0xff]
      %v468 = vld [vmem:[%s2 + $0x5c0] sm:$0xff]
      %v469 = vld [vmem:[%s2 + $0x5c8] sm:$0xff]
      %v470 = vld [vmem:[%s2 + $0x5d0] sm:$0xff]
      %v471 = vld [vmem:[%s2 + $0x5d8] sm:$0xff]
      %v472 = vld [vmem:[%s2 + $0x5e0] sm:$0xff]
      %v473 = vld [vmem:[%s2 + $0x5e8] sm:$0xff]
      %v474 = vld [vmem:[%s2 + $0x5f0] sm:$0xff]
      %v475 = vld [vmem:[%s2 + $0x5f8] sm:$0xff]
      %v476 = vld [vmem:[%s2 + $0x600] sm:$0xff]
      %v477 = vld [vmem:[%s2 + $0x608] sm:$0xff]
      %v478 = vld [vmem:[%s2 + $0x610] sm:$0xff]
      %v479 = vld [vmem:[%s2 + $0x618] sm:$0xff]
      %v480 = vld [vmem:[%s2 + $0x620] sm:$0xff]
      %v481 = vld [vmem:[%s2 + $0x628] sm:$0xff]
      %v482 = vld [vmem:[%s2 + $0x630] sm:$0xff]
      %v483 = vld [vmem:[%s2 + $0x638] sm:$0xff]
      %v484 = vld [vmem:[%s2 + $0x640] sm:$0xff]
      %v485 = vld [vmem:[%s2 + $0x648] sm:$0xff]
      %v486 = vld [vmem:[%s2 + $0x650] sm:$0xff]
      %v487 = vld [vmem:[%s2 + $0x658] sm:$0xff]
      %v488 = vld [vmem:[%s2 + $0x660] sm:$0xff]
      %v489 = vld [vmem:[%s2 + $0x668] sm:$0xff]
      %v490 = vld [vmem:[%s2 + $0x670] sm:$0xff]
      %v491 = vld [vmem:[%s2 + $0x678] sm:$0xff]
      %v492 = vld [vmem:[%s2 + $0x680] sm:$0xff]
      %v493 = vld [vmem:[%s2 + $0x688] sm:$0xff]
      %v494 = vld [vmem:[%s2 + $0x690] sm:$0xff]
      %v495 = vld [vmem:[%s2 + $0x698] sm:$0xff]
      %v496 = vld [vmem:[%s2 + $0x6a0] sm:$0xff]
      %v497 = vld [vmem:[%s2 + $0x6a8] sm:$0xff]
      %v498 = vld [vmem:[%s2 + $0x6b0] sm:$0xff]
      %v499 = vld [vmem:[%s2 + $0x6b8] sm:$0xff]
      %v500 = vld [vmem:[%s2 + $0x6c0] sm:$0xff]
      %v501 = vld [vmem:[%s2 + $0x6c8] sm:$0xff]
      %v502 = vld [vmem:[%s2 + $0x6d0] sm:$0xff]
      %v503 = vld [vmem:[%s2 + $0x6d8] sm:$0xff]
      %v504 = vld [vmem:[%s2 + $0x6e0] sm:$0xff]
      %v505 = vld [vmem:[%s2 + $0x6e8] sm:$0xff]
      %v506 = vld [vmem:[%s2 + $0x6f0] sm:$0xff]
      %v507 = vld [vmem:[%s2 + $0x6f8] sm:$0xff]
      %v508 = vld [vmem:[%s2 + $0x700] sm:$0xff]
      %v509 = vld [vmem:[%s2 + $0x708] sm:$0xff]
      %v510 = vld [vmem:[%s2 + $0x710] sm:$0xff]
      %v511 = vld [vmem:[%s2 + $0x718] sm:$0xff]
      %v512 = vld [vmem:[%s2 + $0x720] sm:$0xff]
      %v513 = vld [vmem:[%s2 + $0x728] sm:$0xff]
      %v514 = vld [vmem:[%s2 + $0x730] sm:$0xff]
      %v515 = vld [vmem:[%s2 + $0x738] sm:$0xff]
      %v516 = vld [vmem:[%s2 + $0x740] sm:$0xff]
      %v517 = vld [vmem:[%s2 + $0x748] sm:$0xff]
      %v518 = vld [vmem:[%s2 + $0x750] sm:$0xff]
      %v519 = vld [vmem:[%s2 + $0x758] sm:$0xff]
      %v520 = vld [vmem:[%s2 + $0x760] sm:$0xff]
      %v521 = vld [vmem:[%s2 + $0x768] sm:$0xff]
      %v522 = vld [vmem:[%s2 + $0x770] sm:$0xff]
      %v523 = vld [vmem:[%s2 + $0x778] sm:$0xff]
      %v524 = vld [vmem:[%s2 + $0x780] sm:$0xff]
      %v525 = vld [vmem:[%s2 + $0x788] sm:$0xff]
      %v526 = vld [vmem:[%s2 + $0x790] sm:$0xff]
      %v527 = vld [vmem:[%s2 + $0x798] sm:$0xff]
      %v528 = vld [vmem:[%s2 + $0x7a0] sm:$0xff]
      %v529 = vld [vmem:[%s2 + $0x7a8] sm:$0xff]
      %v530 = vld [vmem:[%s2 + $0x7b0] sm:$0xff]
      %v531 = vld [vmem:[%s2 + $0x7b8] sm:$0xff]
      %v532 = vld [vmem:[%s2 + $0x7c0] sm:$0xff]
      %v533 = vld [vmem:[%s2 + $0x7c8] sm:$0xff]
      %v534 = vld [vmem:[%s2 + $0x7d0] sm:$0xff]
      %v535 = vld [vmem:[%s2 + $0x7d8] sm:$0xff]
      %v536 = vld [vmem:[%s2 + $0x7e0] sm:$0xff]
      %v537 = vld [vmem:[%s2 + $0x7e8] sm:$0xff]
      %v538 = vld [vmem:[%s2 + $0x7f0] sm:$0xff]
      %v539 = vld [vmem:[%s2 + $0x7f8] sm:$0xff]
      %v540 = vld [vmem:[%s267] sm:$0xff]
      %v541 = vld [vmem:[%s267 + $0x8] sm:$0xff]
      %v542 = vld [vmem:[%s267 + $0x10] sm:$0xff]
      %v543 = vld [vmem:[%s267 + $0x18] sm:$0xff]
      %v544 = vld [vmem:[%s3] sm:$0xff]
      %v545 = vld [vmem:[%s3 + $0x8] sm:$0xff]
      %v546 = vld [vmem:[%s3 + $0x10] sm:$0xff]
      %v547 = vld [vmem:[%s3 + $0x18] sm:$0xff]
      %v548 = vld [vmem:[%s3 + $0x20] sm:$0xff]
      %v549 = vld [vmem:[%s3 + $0x28] sm:$0xff]
      %v550 = vld [vmem:[%s3 + $0x30] sm:$0xff]
      %v551 = vld [vmem:[%s3 + $0x38] sm:$0xff]
      %v552 = vld [vmem:[%s3 + $0x40] sm:$0xff]
      %v553 = vld [vmem:[%s3 + $0x48] sm:$0xff]
      %v554 = vld [vmem:[%s3 + $0x50] sm:$0xff]
      %v555 = vld [vmem:[%s3 + $0x58] sm:$0xff]
      %v556 = vld [vmem:[%s3 + $0x60] sm:$0xff]
      %v557 = vld [vmem:[%s3 + $0x68] sm:$0xff]
      %v558 = vld [vmem:[%s3 + $0x70] sm:$0xff]
      %v559 = vld [vmem:[%s3 + $0x78] sm:$0xff]
      %v560 = vld [vmem:[%s3 + $0x80] sm:$0xff]
      %v561 = vld [vmem:[%s3 + $0x88] sm:$0xff]
      %v562 = vld [vmem:[%s3 + $0x90] sm:$0xff]
      %v563 = vld [vmem:[%s3 + $0x98] sm:$0xff]
      %v564 = vld [vmem:[%s3 + $0xa0] sm:$0xff]
      %v565 = vld [vmem:[%s3 + $0xa8] sm:$0xff]
      %v566 = vld [vmem:[%s3 + $0xb0] sm:$0xff]
      %v567 = vld [vmem:[%s3 + $0xb8] sm:$0xff]
      %v568 = vld [vmem:[%s3 + $0xc0] sm:$0xff]
      %v569 = vld [vmem:[%s3 + $0xc8] sm:$0xff]
      %v570 = vld [vmem:[%s3 + $0xd0] sm:$0xff]
      %v571 = vld [vmem:[%s3 + $0xd8] sm:$0xff]
      %v572 = vld [vmem:[%s3 + $0xe0] sm:$0xff]
      %v573 = vld [vmem:[%s3 + $0xe8] sm:$0xff]
      %v574 = vld [vmem:[%s3 + $0xf0] sm:$0xff]
      %v575 = vld [vmem:[%s3 + $0xf8] sm:$0xff]
      %v576 = vld [vmem:[%s3 + $0x100] sm:$0xff]
      %v577 = vld [vmem:[%s3 + $0x108] sm:$0xff]
      %v578 = vld [vmem:[%s3 + $0x110] sm:$0xff]
      %v579 = vld [vmem:[%s3 + $0x118] sm:$0xff]
      %v580 = vld [vmem:[%s3 + $0x120] sm:$0xff]
      %v581 = vld [vmem:[%s3 + $0x128] sm:$0xff]
      %v582 = vld [vmem:[%s3 + $0x130] sm:$0xff]
      %v583 = vld [vmem:[%s3 + $0x138] sm:$0xff]
      %v584 = vld [vmem:[%s3 + $0x140] sm:$0xff]
      %v585 = vld [vmem:[%s3 + $0x148] sm:$0xff]
      %v586 = vld [vmem:[%s3 + $0x150] sm:$0xff]
      %v587 = vld [vmem:[%s3 + $0x158] sm:$0xff]
      %v588 = vld [vmem:[%s3 + $0x160] sm:$0xff]
      %v589 = vld [vmem:[%s3 + $0x168] sm:$0xff]
      %v590 = vld [vmem:[%s3 + $0x170] sm:$0xff]
      %v591 = vld [vmem:[%s3 + $0x178] sm:$0xff]
      %v592 = vld [vmem:[%s3 + $0x180] sm:$0xff]
      %v593 = vld [vmem:[%s3 + $0x188] sm:$0xff]
      %v594 = vld [vmem:[%s3 + $0x190] sm:$0xff]
      %v595 = vld [vmem:[%s3 + $0x198] sm:$0xff]
      %v596 = vld [vmem:[%s3 + $0x1a0] sm:$0xff]
      %v597 = vld [vmem:[%s3 + $0x1a8] sm:$0xff]
      %v598 = vld [vmem:[%s3 + $0x1b0] sm:$0xff]
      %v599 = vld [vmem:[%s3 + $0x1b8] sm:$0xff]
      %v600 = vld [vmem:[%s3 + $0x1c0] sm:$0xff]
      %v601 = vld [vmem:[%s3 + $0x1c8] sm:$0xff]
      %v602 = vld [vmem:[%s3 + $0x1d0] sm:$0xff]
      %v603 = vld [vmem:[%s3 + $0x1d8] sm:$0xff]
      %v604 = vld [vmem:[%s3 + $0x1e0] sm:$0xff]
      %v605 = vld [vmem:[%s3 + $0x1e8] sm:$0xff]
      %v606 = vld [vmem:[%s3 + $0x1f0] sm:$0xff]
      %v607 = vld [vmem:[%s3 + $0x1f8] sm:$0xff]
      %v608 = vld [vmem:[%s3 + $0x200] sm:$0xff]
      %v609 = vld [vmem:[%s3 + $0x208] sm:$0xff]
      %v610 = vld [vmem:[%s3 + $0x210] sm:$0xff]
      %v611 = vld [vmem:[%s3 + $0x218] sm:$0xff]
      %v612 = vld [vmem:[%s3 + $0x220] sm:$0xff]
      %v613 = vld [vmem:[%s3 + $0x228] sm:$0xff]
      %v614 = vld [vmem:[%s3 + $0x230] sm:$0xff]
      %v615 = vld [vmem:[%s3 + $0x238] sm:$0xff]
      %v616 = vld [vmem:[%s3 + $0x240] sm:$0xff]
      %v617 = vld [vmem:[%s3 + $0x248] sm:$0xff]
      %v618 = vld [vmem:[%s3 + $0x250] sm:$0xff]
      %v619 = vld [vmem:[%s3 + $0x258] sm:$0xff]
      %v620 = vld [vmem:[%s3 + $0x260] sm:$0xff]
      %v621 = vld [vmem:[%s3 + $0x268] sm:$0xff]
      %v622 = vld [vmem:[%s3 + $0x270] sm:$0xff]
      %v623 = vld [vmem:[%s3 + $0x278] sm:$0xff]
      %v624 = vld [vmem:[%s3 + $0x280] sm:$0xff]
      %v625 = vld [vmem:[%s3 + $0x288] sm:$0xff]
      %v626 = vld [vmem:[%s3 + $0x290] sm:$0xff]
      %v627 = vld [vmem:[%s3 + $0x298] sm:$0xff]
      %v628 = vld [vmem:[%s3 + $0x2a0] sm:$0xff]
      %v629 = vld [vmem:[%s3 + $0x2a8] sm:$0xff]
      %v630 = vld [vmem:[%s3 + $0x2b0] sm:$0xff]
      %v631 = vld [vmem:[%s3 + $0x2b8] sm:$0xff]
      %v632 = vld [vmem:[%s3 + $0x2c0] sm:$0xff]
      %v633 = vld [vmem:[%s3 + $0x2c8] sm:$0xff]
      %v634 = vld [vmem:[%s3 + $0x2d0] sm:$0xff]
      %v635 = vld [vmem:[%s3 + $0x2d8] sm:$0xff]
      %v636 = vld [vmem:[%s3 + $0x2e0] sm:$0xff]
      %v637 = vld [vmem:[%s3 + $0x2e8] sm:$0xff]
      %v638 = vld [vmem:[%s3 + $0x2f0] sm:$0xff]
      %v639 = vld [vmem:[%s3 + $0x2f8] sm:$0xff]
      %v640 = vld [vmem:[%s3 + $0x300] sm:$0xff]
      %v641 = vld [vmem:[%s3 + $0x308] sm:$0xff]
      %v642 = vld [vmem:[%s3 + $0x310] sm:$0xff]
      %v643 = vld [vmem:[%s3 + $0x318] sm:$0xff]
      %v644 = vld [vmem:[%s3 + $0x320] sm:$0xff]
      %v645 = vld [vmem:[%s3 + $0x328] sm:$0xff]
      %v646 = vld [vmem:[%s3 + $0x330] sm:$0xff]
      %v647 = vld [vmem:[%s3 + $0x338] sm:$0xff]
      %v648 = vld [vmem:[%s3 + $0x340] sm:$0xff]
      %v649 = vld [vmem:[%s3 + $0x348] sm:$0xff]
      %v650 = vld [vmem:[%s3 + $0x350] sm:$0xff]
      %v651 = vld [vmem:[%s3 + $0x358] sm:$0xff]
      %v652 = vld [vmem:[%s3 + $0x360] sm:$0xff]
      %v653 = vld [vmem:[%s3 + $0x368] sm:$0xff]
      %v654 = vld [vmem:[%s3 + $0x370] sm:$0xff]
      %v655 = vld [vmem:[%s3 + $0x378] sm:$0xff]
      %v656 = vld [vmem:[%s3 + $0x380] sm:$0xff]
      %v657 = vld [vmem:[%s3 + $0x388] sm:$0xff]
      %v658 = vld [vmem:[%s3 + $0x390] sm:$0xff]
      %v659 = vld [vmem:[%s3 + $0x398] sm:$0xff]
      %v660 = vld [vmem:[%s3 + $0x3a0] sm:$0xff]
      %v661 = vld [vmem:[%s3 + $0x3a8] sm:$0xff]
      %v662 = vld [vmem:[%s3 + $0x3b0] sm:$0xff]
      %v663 = vld [vmem:[%s3 + $0x3b8] sm:$0xff]
      %v664 = vld [vmem:[%s3 + $0x3c0] sm:$0xff]
      %v665 = vld [vmem:[%s3 + $0x3c8] sm:$0xff]
      %v666 = vld [vmem:[%s3 + $0x3d0] sm:$0xff]
      %v667 = vld [vmem:[%s3 + $0x3d8] sm:$0xff]
      %v668 = vld [vmem:[%s3 + $0x3e0] sm:$0xff]
      %v669 = vld [vmem:[%s3 + $0x3e8] sm:$0xff]
      %v670 = vld [vmem:[%s3 + $0x3f0] sm:$0xff]
      %v671 = vld [vmem:[%s3 + $0x3f8] sm:$0xff]
      %v672 = vld [vmem:[%s3 + $0x400] sm:$0xff]
      %v673 = vld [vmem:[%s3 + $0x408] sm:$0xff]
      %v674 = vld [vmem:[%s3 + $0x410] sm:$0xff]
      %v675 = vld [vmem:[%s3 + $0x418] sm:$0xff]
      %v676 = vld [vmem:[%s3 + $0x420] sm:$0xff]
      %v677 = vld [vmem:[%s3 + $0x428] sm:$0xff]
      %v678 = vld [vmem:[%s3 + $0x430] sm:$0xff]
      %v679 = vld [vmem:[%s3 + $0x438] sm:$0xff]
      %v680 = vld [vmem:[%s3 + $0x440] sm:$0xff]
      %v681 = vld [vmem:[%s3 + $0x448] sm:$0xff]
      %v682 = vld [vmem:[%s3 + $0x450] sm:$0xff]
      %v683 = vld [vmem:[%s3 + $0x458] sm:$0xff]
      %v684 = vld [vmem:[%s3 + $0x460] sm:$0xff]
      %v685 = vld [vmem:[%s3 + $0x468] sm:$0xff]
      %v686 = vld [vmem:[%s3 + $0x470] sm:$0xff]
      %v687 = vld [vmem:[%s3 + $0x478] sm:$0xff]
      %v688 = vld [vmem:[%s3 + $0x480] sm:$0xff]
      %v689 = vld [vmem:[%s3 + $0x488] sm:$0xff]
      %v690 = vld [vmem:[%s3 + $0x490] sm:$0xff]
      %v691 = vld [vmem:[%s3 + $0x498] sm:$0xff]
      %v692 = vld [vmem:[%s3 + $0x4a0] sm:$0xff]
      %v693 = vld [vmem:[%s3 + $0x4a8] sm:$0xff]
      %v694 = vld [vmem:[%s3 + $0x4b0] sm:$0xff]
      %v695 = vld [vmem:[%s3 + $0x4b8] sm:$0xff]
      %v696 = vld [vmem:[%s3 + $0x4c0] sm:$0xff]
      %v697 = vld [vmem:[%s3 + $0x4c8] sm:$0xff]
      %v698 = vld [vmem:[%s3 + $0x4d0] sm:$0xff]
      %v699 = vld [vmem:[%s3 + $0x4d8] sm:$0xff]
      %v700 = vld [vmem:[%s3 + $0x4e0] sm:$0xff]
      %v701 = vld [vmem:[%s3 + $0x4e8] sm:$0xff]
      %v702 = vld [vmem:[%s3 + $0x4f0] sm:$0xff]
      %v703 = vld [vmem:[%s3 + $0x4f8] sm:$0xff]
      %v704 = vld [vmem:[%s3 + $0x500] sm:$0xff]
      %v705 = vld [vmem:[%s3 + $0x508] sm:$0xff]
      %v706 = vld [vmem:[%s3 + $0x510] sm:$0xff]
      %v707 = vld [vmem:[%s3 + $0x518] sm:$0xff]
      %v708 = vld [vmem:[%s3 + $0x520] sm:$0xff]
      %v709 = vld [vmem:[%s3 + $0x528] sm:$0xff]
      %v710 = vld [vmem:[%s3 + $0x530] sm:$0xff]
      %v711 = vld [vmem:[%s3 + $0x538] sm:$0xff]
      %v712 = vld [vmem:[%s3 + $0x540] sm:$0xff]
      %v713 = vld [vmem:[%s3 + $0x548] sm:$0xff]
      %v714 = vld [vmem:[%s3 + $0x550] sm:$0xff]
      %v715 = vld [vmem:[%s3 + $0x558] sm:$0xff]
      %v716 = vld [vmem:[%s3 + $0x560] sm:$0xff]
      %v717 = vld [vmem:[%s3 + $0x568] sm:$0xff]
      %v718 = vld [vmem:[%s3 + $0x570] sm:$0xff]
      %v719 = vld [vmem:[%s3 + $0x578] sm:$0xff]
      %v720 = vld [vmem:[%s3 + $0x580] sm:$0xff]
      %v721 = vld [vmem:[%s3 + $0x588] sm:$0xff]
      %v722 = vld [vmem:[%s3 + $0x590] sm:$0xff]
      %v723 = vld [vmem:[%s3 + $0x598] sm:$0xff]
      %v724 = vld [vmem:[%s3 + $0x5a0] sm:$0xff]
      %v725 = vld [vmem:[%s3 + $0x5a8] sm:$0xff]
      %v726 = vld [vmem:[%s3 + $0x5b0] sm:$0xff]
      %v727 = vld [vmem:[%s3 + $0x5b8] sm:$0xff]
      %v728 = vld [vmem:[%s3 + $0x5c0] sm:$0xff]
      %v729 = vld [vmem:[%s3 + $0x5c8] sm:$0xff]
      %v730 = vld [vmem:[%s3 + $0x5d0] sm:$0xff]
      %v731 = vld [vmem:[%s3 + $0x5d8] sm:$0xff]
      %v732 = vld [vmem:[%s3 + $0x5e0] sm:$0xff]
      %v733 = vld [vmem:[%s3 + $0x5e8] sm:$0xff]
      %v734 = vld [vmem:[%s3 + $0x5f0] sm:$0xff]
      %v735 = vld [vmem:[%s3 + $0x5f8] sm:$0xff]
      %v736 = vld [vmem:[%s3 + $0x600] sm:$0xff]
      %v737 = vld [vmem:[%s3 + $0x608] sm:$0xff]
      %v738 = vld [vmem:[%s3 + $0x610] sm:$0xff]
      %v739 = vld [vmem:[%s3 + $0x618] sm:$0xff]
      %v740 = vld [vmem:[%s3 + $0x620] sm:$0xff]
      %v741 = vld [vmem:[%s3 + $0x628] sm:$0xff]
      %v742 = vld [vmem:[%s3 + $0x630] sm:$0xff]
      %v743 = vld [vmem:[%s3 + $0x638] sm:$0xff]
      %v744 = vld [vmem:[%s3 + $0x640] sm:$0xff]
      %v745 = vld [vmem:[%s3 + $0x648] sm:$0xff]
      %v746 = vld [vmem:[%s3 + $0x650] sm:$0xff]
      %v747 = vld [vmem:[%s3 + $0x658] sm:$0xff]
      %v748 = vld [vmem:[%s3 + $0x660] sm:$0xff]
      %v749 = vld [vmem:[%s3 + $0x668] sm:$0xff]
      %v750 = vld [vmem:[%s3 + $0x670] sm:$0xff]
      %v751 = vld [vmem:[%s3 + $0x678] sm:$0xff]
      %v752 = vld [vmem:[%s3 + $0x680] sm:$0xff]
      %v753 = vld [vmem:[%s3 + $0x688] sm:$0xff]
      %v754 = vld [vmem:[%s3 + $0x690] sm:$0xff]
      %v755 = vld [vmem:[%s3 + $0x698] sm:$0xff]
      %v756 = vld [vmem:[%s3 + $0x6a0] sm:$0xff]
      %v757 = vld [vmem:[%s3 + $0x6a8] sm:$0xff]
      %v758 = vld [vmem:[%s3 + $0x6b0] sm:$0xff]
      %v759 = vld [vmem:[%s3 + $0x6b8] sm:$0xff]
      %v760 = vld [vmem:[%s3 + $0x6c0] sm:$0xff]
      %v761 = vld [vmem:[%s3 + $0x6c8] sm:$0xff]
      %v762 = vld [vmem:[%s3 + $0x6d0] sm:$0xff]
      %v763 = vld [vmem:[%s3 + $0x6d8] sm:$0xff]
      %v764 = vld [vmem:[%s3 + $0x6e0] sm:$0xff]
      %v765 = vld [vmem:[%s3 + $0x6e8] sm:$0xff]
      %v766 = vld [vmem:[%s3 + $0x6f0] sm:$0xff]
      %v767 = vld [vmem:[%s3 + $0x6f8] sm:$0xff]
      %v768 = vld [vmem:[%s3 + $0x700] sm:$0xff]
      %v769 = vld [vmem:[%s3 + $0x708] sm:$0xff]
      %v770 = vld [vmem:[%s3 + $0x710] sm:$0xff]
      %v771 = vld [vmem:[%s3 + $0x718] sm:$0xff]
      %v772 = vld [vmem:[%s3 + $0x720] sm:$0xff]
      %v773 = vld [vmem:[%s3 + $0x728] sm:$0xff]
      %v774 = vld [vmem:[%s3 + $0x730] sm:$0xff]
      %v775 = vld [vmem:[%s3 + $0x738] sm:$0xff]
      %v776 = vld [vmem:[%s3 + $0x740] sm:$0xff]
      %v777 = vld [vmem:[%s3 + $0x748] sm:$0xff]
      %v778 = vld [vmem:[%s3 + $0x750] sm:$0xff]
      %v779 = vld [vmem:[%s3 + $0x758] sm:$0xff]
      %v780 = vld [vmem:[%s3 + $0x760] sm:$0xff]
      %v781 = vld [vmem:[%s3 + $0x768] sm:$0xff]
      %v782 = vld [vmem:[%s3 + $0x770] sm:$0xff]
      %v783 = vld [vmem:[%s3 + $0x778] sm:$0xff]
      %v784 = vld [vmem:[%s3 + $0x780] sm:$0xff]
      %v785 = vld [vmem:[%s3 + $0x788] sm:$0xff]
      %v786 = vld [vmem:[%s3 + $0x790] sm:$0xff]
      %v787 = vld [vmem:[%s3 + $0x798] sm:$0xff]
      %v788 = vld [vmem:[%s3 + $0x7a0] sm:$0xff]
      %v789 = vld [vmem:[%s3 + $0x7a8] sm:$0xff]
      %v790 = vld [vmem:[%s3 + $0x7b0] sm:$0xff]
      %v791 = vld [vmem:[%s3 + $0x7b8] sm:$0xff]
      %v792 = vld [vmem:[%s3 + $0x7c0] sm:$0xff]
      %v793 = vld [vmem:[%s3 + $0x7c8] sm:$0xff]
      %v794 = vld [vmem:[%s3 + $0x7d0] sm:$0xff]
      %v795 = vld [vmem:[%s3 + $0x7d8] sm:$0xff]
      %v796 = vld [vmem:[%s3 + $0x7e0] sm:$0xff]
      %v797 = vld [vmem:[%s3 + $0x7e8] sm:$0xff]
      %v798 = vld [vmem:[%s3 + $0x7f0] sm:$0xff]
      %v799 = vld [vmem:[%s3 + $0x7f8] sm:$0xff]
      %800 = vmatprep.subr.mxu0 %v545
      %801 = vmatpush1.msra.mxu0 %v544
      %802 = vmatprep.subr.mxu0 %v549
      %803 = vmatpush1.msra.mxu0 %v548
      %804 = vmatprep.subr.mxu0 %v553
      %805 = vmatpush1.msra.mxu0 %v552
      %806 = vmatprep.subr.mxu0 %v557
      %807 = vmatpush1.msra.mxu0 %v556
      %808 = vmatprep.subr.mxu0 %v561
      %809 = vmatpush1.msra.mxu0 %v560
      %810 = vmatprep.subr.mxu0 %v565
      %811 = vmatpush1.msra.mxu0 %v564
      %812 = vmatprep.subr.mxu0 %v569
      %813 = vmatpush1.msra.mxu0 %v568
      %814 = vmatprep.subr.mxu0 %v573
      %815 = vmatpush1.msra.mxu0 %v572
      %816 = vmatprep.subr.mxu0 %v577
      %817 = vmatpush1.msra.mxu0 %v576
      %818 = vmatprep.subr.mxu0 %v581
      %819 = vmatpush1.msra.mxu0 %v580
      %820 = vmatprep.subr.mxu0 %v585
      %821 = vmatpush1.msra.mxu0 %v584
      %822 = vmatprep.subr.mxu0 %v589
      %823 = vmatpush1.msra.mxu0 %v588
      %824 = vmatprep.subr.mxu0 %v593
      %825 = vmatpush1.msra.mxu0 %v592
      %826 = vmatprep.subr.mxu0 %v597
      %827 = vmatpush1.msra.mxu0 %v596
      %828 = vmatprep.subr.mxu0 %v601
      %829 = vmatpush1.msra.mxu0 %v600
      %830 = vmatprep.subr.mxu0 %v605
      %831 = vmatpush1.msra.mxu0 %v604
      %832 = vmatprep.subr.mxu0 %v609
      %833 = vmatpush1.msra.mxu0 %v608
      %834 = vmatprep.subr.mxu0 %v613
      %835 = vmatpush1.msra.mxu0 %v612
      %836 = vmatprep.subr.mxu0 %v617
      %837 = vmatpush1.msra.mxu0 %v616
      %838 = vmatprep.subr.mxu0 %v621
      %839 = vmatpush1.msra.mxu0 %v620
      %840 = vmatprep.subr.mxu0 %v625
      %841 = vmatpush1.msra.mxu0 %v624
      %842 = vmatprep.subr.mxu0 %v629
      %843 = vmatpush1.msra.mxu0 %v628
      %844 = vmatprep.subr.mxu0 %v633
      %845 = vmatpush1.msra.mxu0 %v632
      %846 = vmatprep.subr.mxu0 %v637
      %847 = vmatpush1.msra.mxu0 %v636
      %848 = vmatprep.subr.mxu0 %v641
      %849 = vmatpush1.msra.mxu0 %v640
      %850 = vmatprep.subr.mxu0 %v645
      %851 = vmatpush1.msra.mxu0 %v644
      %852 = vmatprep.subr.mxu0 %v649
      %853 = vmatpush1.msra.mxu0 %v648
      %854 = vmatprep.subr.mxu0 %v653
      %855 = vmatpush1.msra.mxu0 %v652
      %856 = vmatprep.subr.mxu0 %v657
      %857 = vmatpush1.msra.mxu0 %v656
      %858 = vmatprep.subr.mxu0 %v661
      %859 = vmatpush1.msra.mxu0 %v660
      %860 = vmatprep.subr.mxu0 %v665
      %861 = vmatpush1.msra.mxu0 %v664
      %862 = vmatprep.subr.mxu0 %v669
      %863 = vmatpush1.msra.mxu0 %v668
      %864 = vmatprep.mubr.f32.mxu0 %v541
      %865 = vmatmul.mubr.f32.gmra.mrb[0].mxu0 %v540
      %v866 = vpop.f32.mrb[0].mxu0
      %v867 = vadd.f32 0.0, %v866
      %v868 = vpop.f32.mrb[0].mxu0
      %v869 = vadd.f32 0.0, %v868
      %870 = vdwg.mxu0
      %871 = vmatprep.subr.mxu0 %v673
      %872 = vmatpush1.msra.mxu0 %v672
      %873 = vmatprep.subr.mxu0 %v677
      %874 = vmatpush1.msra.mxu0 %v676
      %875 = vmatprep.subr.mxu0 %v681
      %876 = vmatpush1.msra.mxu0 %v680
      %877 = vmatprep.subr.mxu0 %v685
      %878 = vmatpush1.msra.mxu0 %v684
      %879 = vmatprep.subr.mxu0 %v689
      %880 = vmatpush1.msra.mxu0 %v688
      %881 = vmatprep.subr.mxu0 %v693
      %882 = vmatpush1.msra.mxu0 %v692
      %883 = vmatprep.subr.mxu0 %v697
      %884 = vmatpush1.msra.mxu0 %v696
      %885 = vmatprep.subr.mxu0 %v701
      %886 = vmatpush1.msra.mxu0 %v700
      %887 = vmatprep.subr.mxu0 %v705
      %888 = vmatpush1.msra.mxu0 %v704
      %889 = vmatprep.subr.mxu0 %v709
      %890 = vmatpush1.msra.mxu0 %v708
      %891 = vmatprep.subr.mxu0 %v713
      %892 = vmatpush1.msra.mxu0 %v712
      %893 = vmatprep.subr.mxu0 %v717
      %894 = vmatpush1.msra.mxu0 %v716
      %895 = vmatprep.subr.mxu0 %v721
      %896 = vmatpush1.msra.mxu0 %v720
      %897 = vmatprep.subr.mxu0 %v725
      %898 = vmatpush1.msra.mxu0 %v724
      %899 = vmatprep.subr.mxu0 %v729
      %900 = vmatpush1.msra.mxu0 %v728
      %901 = vmatprep.subr.mxu0 %v733
      %902 = vmatpush1.msra.mxu0 %v732
      %903 = vmatprep.subr.mxu0 %v737
      %904 = vmatpush1.msra.mxu0 %v736
      %905 = vmatprep.subr.mxu0 %v741
      %906 = vmatpush1.msra.mxu0 %v740
      %907 = vmatprep.subr.mxu0 %v745
      %908 = vmatpush1.msra.mxu0 %v744
      %909 = vmatprep.subr.mxu0 %v749
      %910 = vmatpush1.msra.mxu0 %v748
      %911 = vmatprep.subr.mxu0 %v753
      %912 = vmatpush1.msra.mxu0 %v752
      %913 = vmatprep.subr.mxu0 %v757
      %914 = vmatpush1.msra.mxu0 %v756
      %915 = vmatprep.subr.mxu0 %v761
      %916 = vmatpush1.msra.mxu0 %v760
      %917 = vmatprep.subr.mxu0 %v765
      %918 = vmatpush1.msra.mxu0 %v764
      %919 = vmatprep.subr.mxu0 %v769
      %920 = vmatpush1.msra.mxu0 %v768
      %921 = vmatprep.subr.mxu0 %v773
      %922 = vmatpush1.msra.mxu0 %v772
      %923 = vmatprep.subr.mxu0 %v777
      %924 = vmatpush1.msra.mxu0 %v776
      %925 = vmatprep.subr.mxu0 %v781
      %926 = vmatpush1.msra.mxu0 %v780
      %927 = vmatprep.subr.mxu0 %v785
      %928 = vmatpush1.msra.mxu0 %v784
      %929 = vmatprep.subr.mxu0 %v789
      %930 = vmatpush1.msra.mxu0 %v788
      %931 = vmatprep.subr.mxu0 %v793
      %932 = vmatpush1.msra.mxu0 %v792
      %933 = vmatprep.subr.mxu0 %v797
      %934 = vmatpush1.msra.mxu0 %v796
      %935 = vmatprep.mubr.f32.mxu0 %v543
      %936 = vmatmul.mubr.f32.gmra.mrb[0].mxu0 %v542
      %v937 = vpop.f32.mrb[0].mxu0
      %v938 = vadd.f32 %v867, %v937
      %v939 = vpop.f32.mrb[0].mxu0
      %v940 = vadd.f32 %v869, %v939
      %941 = vdwg.mxu0
      %942 = vmatprep.subr.mxu0 %v547
      %943 = vmatpush1.msra.mxu0 %v546
      %944 = vmatprep.subr.mxu0 %v551
      %945 = vmatpush1.msra.mxu0 %v550
      %946 = vmatprep.subr.mxu0 %v555
      %947 = vmatpush1.msra.mxu0 %v554
      %948 = vmatprep.subr.mxu0 %v559
      %949 = vmatpush1.msra.mxu0 %v558
      %950 = vmatprep.subr.mxu0 %v563
      %951 = vmatpush1.msra.mxu0 %v562
      %952 = vmatprep.subr.mxu0 %v567
      %953 = vmatpush1.msra.mxu0 %v566
      %954 = vmatprep.subr.mxu0 %v571
      %955 = vmatpush1.msra.mxu0 %v570
      %956 = vmatprep.subr.mxu0 %v575
      %957 = vmatpush1.msra.mxu0 %v574
      %958 = vmatprep.subr.mxu0 %v579
      %959 = vmatpush1.msra.mxu0 %v578
      %960 = vmatprep.subr.mxu0 %v583
      %961 = vmatpush1.msra.mxu0 %v582
      %962 = vmatprep.subr.mxu0 %v587
      %963 = vmatpush1.msra.mxu0 %v586
      %964 = vmatprep.subr.mxu0 %v591
      %965 = vmatpush1.msra.mxu0 %v590
      %966 = vmatprep.subr.mxu0 %v595
      %967 = vmatpush1.msra.mxu0 %v594
      %968 = vmatprep.subr.mxu0 %v599
      %969 = vmatpush1.msra.mxu0 %v598
      %970 = vmatprep.subr.mxu0 %v603
      %971 = vmatpush1.msra.mxu0 %v602
      %972 = vmatprep.subr.mxu0 %v607
      %973 = vmatpush1.msra.mxu0 %v606
      %974 = vmatprep.subr.mxu0 %v611
      %975 = vmatpush1.msra.mxu0 %v610
      %976 = vmatprep.subr.mxu0 %v615
      %977 = vmatpush1.msra.mxu0 %v614
      %978 = vmatprep.subr.mxu0 %v619
      %979 = vmatpush1.msra.mxu0 %v618
      %980 = vmatprep.subr.mxu0 %v623
      %981 = vmatpush1.msra.mxu0 %v622
      %982 = vmatprep.subr.mxu0 %v627
      %983 = vmatpush1.msra.mxu0 %v626
      %984 = vmatprep.subr.mxu0 %v631
      %985 = vmatpush1.msra.mxu0 %v630
      %986 = vmatprep.subr.mxu0 %v635
      %987 = vmatpush1.msra.mxu0 %v634
      %988 = vmatprep.subr.mxu0 %v639
      %989 = vmatpush1.msra.mxu0 %v638
      %990 = vmatprep.subr.mxu0 %v643
      %991 = vmatpush1.msra.mxu0 %v642
      %992 = vmatprep.subr.mxu0 %v647
      %993 = vmatpush1.msra.mxu0 %v646
      %994 = vmatprep.subr.mxu0 %v651
      %995 = vmatpush1.msra.mxu0 %v650
      %996 = vmatprep.subr.mxu0 %v655
      %997 = vmatpush1.msra.mxu0 %v654
      %998 = vmatprep.subr.mxu0 %v659
      %999 = vmatpush1.msra.mxu0 %v658
      %1000 = vmatprep.subr.mxu0 %v663
      %1001 = vmatpush1.msra.mxu0 %v662
      %1002 = vmatprep.subr.mxu0 %v667
      %1003 = vmatpush1.msra.mxu0 %v666
      %1004 = vmatprep.subr.mxu0 %v671
      %1005 = vmatpush1.msra.mxu0 %v670
      %1006 = vmatprep.mubr.f32.mxu0 %v541
      %1007 = vmatmul.mubr.f32.gmra.mrb[0].mxu0 %v540
      %v1008 = vpop.f32.mrb[0].mxu0
      %v1009 = vadd.f32 0.0, %v1008
      %v1010 = vpop.f32.mrb[0].mxu0
      %v1011 = vadd.f32 0.0, %v1010
      %1012 = vdwg.mxu0
      %1013 = vmatprep.subr.mxu0 %v675
      %1014 = vmatpush1.msra.mxu0 %v674
      %1015 = vmatprep.subr.mxu0 %v679
      %1016 = vmatpush1.msra.mxu0 %v678
      %1017 = vmatprep.subr.mxu0 %v683
      %1018 = vmatpush1.msra.mxu0 %v682
      %1019 = vmatprep.subr.mxu0 %v687
      %1020 = vmatpush1.msra.mxu0 %v686
      %1021 = vmatprep.subr.mxu0 %v691
      %1022 = vmatpush1.msra.mxu0 %v690
      %1023 = vmatprep.subr.mxu0 %v695
      %1024 = vmatpush1.msra.mxu0 %v694
      %1025 = vmatprep.subr.mxu0 %v699
      %1026 = vmatpush1.msra.mxu0 %v698
      %1027 = vmatprep.subr.mxu0 %v703
      %1028 = vmatpush1.msra.mxu0 %v702
      %1029 = vmatprep.subr.mxu0 %v707
      %1030 = vmatpush1.msra.mxu0 %v706
      %1031 = vmatprep.subr.mxu0 %v711
      %1032 = vmatpush1.msra.mxu0 %v710
      %1033 = vmatprep.subr.mxu0 %v715
      %1034 = vmatpush1.msra.mxu0 %v714
      %1035 = vmatprep.subr.mxu0 %v719
      %1036 = vmatpush1.msra.mxu0 %v718
      %1037 = vmatprep.subr.mxu0 %v723
      %1038 = vmatpush1.msra.mxu0 %v722
      %1039 = vmatprep.subr.mxu0 %v727
      %1040 = vmatpush1.msra.mxu0 %v726
      %1041 = vmatprep.subr.mxu0 %v731
      %1042 = vmatpush1.msra.mxu0 %v730
      %1043 = vmatprep.subr.mxu0 %v735
      %1044 = vmatpush1.msra.mxu0 %v734
      %1045 = vmatprep.subr.mxu0 %v739
      %1046 = vmatpush1.msra.mxu0 %v738
      %1047 = vmatprep.subr.mxu0 %v743
      %1048 = vmatpush1.msra.mxu0 %v742
      %1049 = vmatprep.subr.mxu0 %v747
      %1050 = vmatpush1.msra.mxu0 %v746
      %1051 = vmatprep.subr.mxu0 %v751
      %1052 = vmatpush1.msra.mxu0 %v750
      %1053 = vmatprep.subr.mxu0 %v755
      %1054 = vmatpush1.msra.mxu0 %v754
      %1055 = vmatprep.subr.mxu0 %v759
      %1056 = vmatpush1.msra.mxu0 %v758
      %1057 = vmatprep.subr.mxu0 %v763
      %1058 = vmatpush1.msra.mxu0 %v762
      %1059 = vmatprep.subr.mxu0 %v767
      %1060 = vmatpush1.msra.mxu0 %v766
      %1061 = vmatprep.subr.mxu0 %v771
      %1062 = vmatpush1.msra.mxu0 %v770
      %1063 = vmatprep.subr.mxu0 %v775
      %1064 = vmatpush1.msra.mxu0 %v774
      %1065 = vmatprep.subr.mxu0 %v779
      %1066 = vmatpush1.msra.mxu0 %v778
      %1067 = vmatprep.subr.mxu0 %v783
      %1068 = vmatpush1.msra.mxu0 %v782
      %1069 = vmatprep.subr.mxu0 %v787
      %1070 = vmatpush1.msra.mxu0 %v786
      %1071 = vmatprep.subr.mxu0 %v791
      %1072 = vmatpush1.msra.mxu0 %v790
      %1073 = vmatprep.subr.mxu0 %v795
      %1074 = vmatpush1.msra.mxu0 %v794
      %1075 = vmatprep.subr.mxu0 %v799
      %1076 = vmatpush1.msra.mxu0 %v798
      %1077 = vmatprep.mubr.f32.mxu0 %v543
      %1078 = vmatmul.mubr.f32.gmra.mrb[0].mxu0 %v542
      %v1079 = vpop.f32.mrb[0].mxu0
      %v1080 = vadd.f32 %v1009, %v1079
      %v1081 = vpop.f32.mrb[0].mxu0
      %v1082 = vadd.f32 %v1011, %v1081
      %1083 = vdwg.mxu0
      %1084 = vmatprep.subr.mxu0 %v285
      %1085 = vmatpush1.msra.mxu0 %v284
      %1086 = vmatprep.subr.mxu0 %v289
      %1087 = vmatpush1.msra.mxu0 %v288
      %1088 = vmatprep.subr.mxu0 %v293
      %1089 = vmatpush1.msra.mxu0 %v292
      %1090 = vmatprep.subr.mxu0 %v297
      %1091 = vmatpush1.msra.mxu0 %v296
      %1092 = vmatprep.subr.mxu0 %v301
      %1093 = vmatpush1.msra.mxu0 %v300
      %1094 = vmatprep.subr.mxu0 %v305
      %1095 = vmatpush1.msra.mxu0 %v304
      %1096 = vmatprep.subr.mxu0 %v309
      %1097 = vmatpush1.msra.mxu0 %v308
      %1098 = vmatprep.subr.mxu0 %v313
      %1099 = vmatpush1.msra.mxu0 %v312
      %1100 = vmatprep.subr.mxu0 %v317
      %1101 = vmatpush1.msra.mxu0 %v316
      %1102 = vmatprep.subr.mxu0 %v321
      %1103 = vmatpush1.msra.mxu0 %v320
      %1104 = vmatprep.subr.mxu0 %v325
      %1105 = vmatpush1.msra.mxu0 %v324
      %1106 = vmatprep.subr.mxu0 %v329
      %1107 = vmatpush1.msra.mxu0 %v328
      %1108 = vmatprep.subr.mxu0 %v333
      %1109 = vmatpush1.msra.mxu0 %v332
      %1110 = vmatprep.subr.mxu0 %v337
      %1111 = vmatpush1.msra.mxu0 %v336
      %1112 = vmatprep.subr.mxu0 %v341
      %1113 = vmatpush1.msra.mxu0 %v340
      %1114 = vmatprep.subr.mxu0 %v345
      %1115 = vmatpush1.msra.mxu0 %v344
      %1116 = vmatprep.subr.mxu0 %v349
      %1117 = vmatpush1.msra.mxu0 %v348
      %1118 = vmatprep.subr.mxu0 %v353
      %1119 = vmatpush1.msra.mxu0 %v352
      %1120 = vmatprep.subr.mxu0 %v357
      %1121 = vmatpush1.msra.mxu0 %v356
      %1122 = vmatprep.subr.mxu0 %v361
      %1123 = vmatpush1.msra.mxu0 %v360
      %1124 = vmatprep.subr.mxu0 %v365
      %1125 = vmatpush1.msra.mxu0 %v364
      %1126 = vmatprep.subr.mxu0 %v369
      %1127 = vmatpush1.msra.mxu0 %v368
      %1128 = vmatprep.subr.mxu0 %v373
      %1129 = vmatpush1.msra.mxu0 %v372
      %1130 = vmatprep.subr.mxu0 %v377
      %1131 = vmatpush1.msra.mxu0 %v376
      %1132 = vmatprep.subr.mxu0 %v381
      %1133 = vmatpush1.msra.mxu0 %v380
      %1134 = vmatprep.subr.mxu0 %v385
      %1135 = vmatpush1.msra.mxu0 %v384
      %1136 = vmatprep.subr.mxu0 %v389
      %1137 = vmatpush1.msra.mxu0 %v388
      %1138 = vmatprep.subr.mxu0 %v393
      %1139 = vmatpush1.msra.mxu0 %v392
      %1140 = vmatprep.subr.mxu0 %v397
      %1141 = vmatpush1.msra.mxu0 %v396
      %1142 = vmatprep.subr.mxu0 %v401
      %1143 = vmatpush1.msra.mxu0 %v400
      %1144 = vmatprep.subr.mxu0 %v405
      %1145 = vmatpush1.msra.mxu0 %v404
      %1146 = vmatprep.subr.mxu0 %v409
      %1147 = vmatpush1.msra.mxu0 %v408
      %1148 = vmatprep.mubr.f32.mxu0 %v281
      %1149 = vmatmul.mubr.f32.gmra.mrb[0].mxu0 %v280
      %v1150 = vpop.f32.mrb[0].mxu0
      %v1151 = vadd.f32 %v938, %v1150
      %v1152 = vpop.f32.mrb[0].mxu0
      %v1153 = vadd.f32 %v940, %v1152
      %1154 = vdwg.mxu0
      %1155 = vmatprep.subr.mxu0 %v413
      %1156 = vmatpush1.msra.mxu0 %v412
      %1157 = vmatprep.subr.mxu0 %v417
      %1158 = vmatpush1.msra.mxu0 %v416
      %1159 = vmatprep.subr.mxu0 %v421
      %1160 = vmatpush1.msra.mxu0 %v420
      %1161 = vmatprep.subr.mxu0 %v425
      %1162 = vmatpush1.msra.mxu0 %v424
      %1163 = vmatprep.subr.mxu0 %v429
      %1164 = vmatpush1.msra.mxu0 %v428
      %1165 = vmatprep.subr.mxu0 %v433
      %1166 = vmatpush1.msra.mxu0 %v432
      %1167 = vmatprep.subr.mxu0 %v437
      %1168 = vmatpush1.msra.mxu0 %v436
      %1169 = vmatprep.subr.mxu0 %v441
      %1170 = vmatpush1.msra.mxu0 %v440
      %1171 = vmatprep.subr.mxu0 %v445
      %1172 = vmatpush1.msra.mxu0 %v444
      %1173 = vmatprep.subr.mxu0 %v449
      %1174 = vmatpush1.msra.mxu0 %v448
      %1175 = vmatprep.subr.mxu0 %v453
      %1176 = vmatpush1.msra.mxu0 %v452
      %1177 = vmatprep.subr.mxu0 %v457
      %1178 = vmatpush1.msra.mxu0 %v456
      %1179 = vmatprep.subr.mxu0 %v461
      %1180 = vmatpush1.msra.mxu0 %v460
      %1181 = vmatprep.subr.mxu0 %v465
      %1182 = vmatpush1.msra.mxu0 %v464
      %1183 = vmatprep.subr.mxu0 %v469
      %1184 = vmatpush1.msra.mxu0 %v468
      %1185 = vmatprep.subr.mxu0 %v473
      %1186 = vmatpush1.msra.mxu0 %v472
      %1187 = vmatprep.subr.mxu0 %v477
      %1188 = vmatpush1.msra.mxu0 %v476
      %1189 = vmatprep.subr.mxu0 %v481
      %1190 = vmatpush1.msra.mxu0 %v480
      %1191 = vmatprep.subr.mxu0 %v485
      %1192 = vmatpush1.msra.mxu0 %v484
      %1193 = vmatprep.subr.mxu0 %v489
      %1194 = vmatpush1.msra.mxu0 %v488
      %1195 = vmatprep.subr.mxu0 %v493
      %1196 = vmatpush1.msra.mxu0 %v492
      %1197 = vmatprep.subr.mxu0 %v497
      %1198 = vmatpush1.msra.mxu0 %v496
      %1199 = vmatprep.subr.mxu0 %v501
      %1200 = vmatpush1.msra.mxu0 %v500
      %1201 = vmatprep.subr.mxu0 %v505
      %1202 = vmatpush1.msra.mxu0 %v504
      %1203 = vmatprep.subr.mxu0 %v509
      %1204 = vmatpush1.msra.mxu0 %v508
      %1205 = vmatprep.subr.mxu0 %v513
      %1206 = vmatpush1.msra.mxu0 %v512
      %1207 = vmatprep.subr.mxu0 %v517
      %1208 = vmatpush1.msra.mxu0 %v516
      %1209 = vmatprep.subr.mxu0 %v521
      %1210 = vmatpush1.msra.mxu0 %v520
      %1211 = vmatprep.subr.mxu0 %v525
      %1212 = vmatpush1.msra.mxu0 %v524
      %1213 = vmatprep.subr.mxu0 %v529
      %1214 = vmatpush1.msra.mxu0 %v528
      %1215 = vmatprep.subr.mxu0 %v533
      %1216 = vmatpush1.msra.mxu0 %v532
      %1217 = vmatprep.subr.mxu0 %v537
      %1218 = vmatpush1.msra.mxu0 %v536
      %1219 = vmatprep.mubr.f32.mxu0 %v283
      %1220 = vmatmul.mubr.f32.gmra.mrb[0].mxu0 %v282
      %v1221 = vpop.f32.mrb[0].mxu0
      %v1222 = vadd.f32 %v1151, %v1221
      %v1223 = vpop.f32.mrb[0].mxu0
      %v1224 = vadd.f32 %v1153, %v1223
      %1225 = vdwg.mxu0
      %1226 = vmatprep.subr.mxu0 %v287
      %1227 = vmatpush1.msra.mxu0 %v286
      %1228 = vmatprep.subr.mxu0 %v291
      %1229 = vmatpush1.msra.mxu0 %v290
      %1230 = vmatprep.subr.mxu0 %v295
      %1231 = vmatpush1.msra.mxu0 %v294
      %1232 = vmatprep.subr.mxu0 %v299
      %1233 = vmatpush1.msra.mxu0 %v298
      %1234 = vmatprep.subr.mxu0 %v303
      %1235 = vmatpush1.msra.mxu0 %v302
      %1236 = vmatprep.subr.mxu0 %v307
      %1237 = vmatpush1.msra.mxu0 %v306
      %1238 = vmatprep.subr.mxu0 %v311
      %1239 = vmatpush1.msra.mxu0 %v310
      %1240 = vmatprep.subr.mxu0 %v315
      %1241 = vmatpush1.msra.mxu0 %v314
      %1242 = vmatprep.subr.mxu0 %v319
      %1243 = vmatpush1.msra.mxu0 %v318
      %1244 = vmatprep.subr.mxu0 %v323
      %1245 = vmatpush1.msra.mxu0 %v322
      %1246 = vmatprep.subr.mxu0 %v327
      %1247 = vmatpush1.msra.mxu0 %v326
      %1248 = vmatprep.subr.mxu0 %v331
      %1249 = vmatpush1.msra.mxu0 %v330
      %1250 = vmatprep.subr.mxu0 %v335
      %1251 = vmatpush1.msra.mxu0 %v334
      %1252 = vmatprep.subr.mxu0 %v339
      %1253 = vmatpush1.msra.mxu0 %v338
      %1254 = vmatprep.subr.mxu0 %v343
      %1255 = vmatpush1.msra.mxu0 %v342
      %1256 = vmatprep.subr.mxu0 %v347
      %1257 = vmatpush1.msra.mxu0 %v346
      %1258 = vmatprep.subr.mxu0 %v351
      %1259 = vmatpush1.msra.mxu0 %v350
      %1260 = vmatprep.subr.mxu0 %v355
      %1261 = vmatpush1.msra.mxu0 %v354
      %1262 = vmatprep.subr.mxu0 %v359
      %1263 = vmatpush1.msra.mxu0 %v358
      %1264 = vmatprep.subr.mxu0 %v363
      %1265 = vmatpush1.msra.mxu0 %v362
      %1266 = vmatprep.subr.mxu0 %v367
      %1267 = vmatpush1.msra.mxu0 %v366
      %1268 = vmatprep.subr.mxu0 %v371
      %1269 = vmatpush1.msra.mxu0 %v370
      %1270 = vmatprep.subr.mxu0 %v375
      %1271 = vmatpush1.msra.mxu0 %v374
      %1272 = vmatprep.subr.mxu0 %v379
      %1273 = vmatpush1.msra.mxu0 %v378
      %1274 = vmatprep.subr.mxu0 %v383
      %1275 = vmatpush1.msra.mxu0 %v382
      %1276 = vmatprep.subr.mxu0 %v387
      %1277 = vmatpush1.msra.mxu0 %v386
      %1278 = vmatprep.subr.mxu0 %v391
      %1279 = vmatpush1.msra.mxu0 %v390
      %1280 = vmatprep.subr.mxu0 %v395
      %1281 = vmatpush1.msra.mxu0 %v394
      %1282 = vmatprep.subr.mxu0 %v399
      %1283 = vmatpush1.msra.mxu0 %v398
      %1284 = vmatprep.subr.mxu0 %v403
      %1285 = vmatpush1.msra.mxu0 %v402
      %1286 = vmatprep.subr.mxu0 %v407
      %1287 = vmatpush1.msra.mxu0 %v406
      %1288 = vmatprep.subr.mxu0 %v411
      %1289 = vmatpush1.msra.mxu0 %v410
      %1290 = vmatprep.mubr.f32.mxu0 %v281
      %1291 = vmatmul.mubr.f32.gmra.mrb[0].mxu0 %v280
      %v1292 = vpop.f32.mrb[0].mxu0
      %v1293 = vadd.f32 %v1080, %v1292
      %v1294 = vpop.f32.mrb[0].mxu0
      %v1295 = vadd.f32 %v1082, %v1294
      %1296 = vdwg.mxu0
      %1297 = vmatprep.subr.mxu0 %v415
      %1298 = vmatpush1.msra.mxu0 %v414
      %1299 = vmatprep.subr.mxu0 %v419
      %1300 = vmatpush1.msra.mxu0 %v418
      %1301 = vmatprep.subr.mxu0 %v423
      %1302 = vmatpush1.msra.mxu0 %v422
      %1303 = vmatprep.subr.mxu0 %v427
      %1304 = vmatpush1.msra.mxu0 %v426
      %1305 = vmatprep.subr.mxu0 %v431
      %1306 = vmatpush1.msra.mxu0 %v430
      %1307 = vmatprep.subr.mxu0 %v435
      %1308 = vmatpush1.msra.mxu0 %v434
      %1309 = vmatprep.subr.mxu0 %v439
      %1310 = vmatpush1.msra.mxu0 %v438
      %1311 = vmatprep.subr.mxu0 %v443
      %1312 = vmatpush1.msra.mxu0 %v442
      %1313 = vmatprep.subr.mxu0 %v447
      %1314 = vmatpush1.msra.mxu0 %v446
      %1315 = vmatprep.subr.mxu0 %v451
      %1316 = vmatpush1.msra.mxu0 %v450
      %1317 = vmatprep.subr.mxu0 %v455
      %1318 = vmatpush1.msra.mxu0 %v454
      %1319 = vmatprep.subr.mxu0 %v459
      %1320 = vmatpush1.msra.mxu0 %v458
      %1321 = vmatprep.subr.mxu0 %v463
      %1322 = vmatpush1.msra.mxu0 %v462
      %1323 = vmatprep.subr.mxu0 %v467
      %1324 = vmatpush1.msra.mxu0 %v466
      %1325 = vmatprep.subr.mxu0 %v471
      %1326 = vmatpush1.msra.mxu0 %v470
      %1327 = vmatprep.subr.mxu0 %v475
      %1328 = vmatpush1.msra.mxu0 %v474
      %1329 = vmatprep.subr.mxu0 %v479
      %1330 = vmatpush1.msra.mxu0 %v478
      %1331 = vmatprep.subr.mxu0 %v483
      %1332 = vmatpush1.msra.mxu0 %v482
      %1333 = vmatprep.subr.mxu0 %v487
      %1334 = vmatpush1.msra.mxu0 %v486
      %1335 = vmatprep.subr.mxu0 %v491
      %1336 = vmatpush1.msra.mxu0 %v490
      %1337 = vmatprep.subr.mxu0 %v495
      %1338 = vmatpush1.msra.mxu0 %v494
      %1339 = vmatprep.subr.mxu0 %v499
      %1340 = vmatpush1.msra.mxu0 %v498
      %1341 = vmatprep.subr.mxu0 %v503
      %1342 = vmatpush1.msra.mxu0 %v502
      %1343 = vmatprep.subr.mxu0 %v507
      %1344 = vmatpush1.msra.mxu0 %v506
      %1345 = vmatprep.subr.mxu0 %v511
      %1346 = vmatpush1.msra.mxu0 %v510
      %1347 = vmatprep.subr.mxu0 %v515
      %1348 = vmatpush1.msra.mxu0 %v514
      %1349 = vmatprep.subr.mxu0 %v519
      %1350 = vmatpush1.msra.mxu0 %v518
      %1351 = vmatprep.subr.mxu0 %v523
      %1352 = vmatpush1.msra.mxu0 %v522
      %1353 = vmatprep.subr.mxu0 %v527
      %1354 = vmatpush1.msra.mxu0 %v526
      %1355 = vmatprep.subr.mxu0 %v531
      %1356 = vmatpush1.msra.mxu0 %v530
      %1357 = vmatprep.subr.mxu0 %v535
      %1358 = vmatpush1.msra.mxu0 %v534
      %1359 = vmatprep.subr.mxu0 %v539
      %1360 = vmatpush1.msra.mxu0 %v538
      %1361 = vmatprep.mubr.f32.mxu0 %v283
      %1362 = vmatmul.mubr.f32.gmra.mrb[0].mxu0 %v282
      %v1363 = vpop.f32.mrb[0].mxu0
      %v1364 = vadd.f32 %v1293, %v1363
      %v1365 = vpop.f32.mrb[0].mxu0
      %v1366 = vadd.f32 %v1295, %v1365
      %1367 = vdwg.mxu0
      %1368 = vst [vmem:[%s278] sm:$0xff] %v1222
      %1369 = vst [vmem:[%s278 + $0x8] sm:$0xff] %v1224
      %1370 = vst [vmem:[%s278 + $0x10] sm:$0xff] %v1364
      %1371 = vst [vmem:[%s278 + $0x18] sm:$0xff] %v1366
      %s1372 = smul.u32 4, %s20
      %p1373 = scmp.lt.s32.totalorder %s19, 0
      %s1374 = scalar_select %p1373, %s19, 0
      %p1375 = scmp.lt.s32.totalorder %s1372, 7
      %s1376 = scalar_select %p1375, %s1372, 7
      %s1377 = smul.addr %s1374, 8
      %s1378 = sadd.s32 %s1376, %s1377
      %s1379 = smul.addr %s1378, 8
      %s1380 = scalar_lea.vmem %s4, %s1379
      // Predicated region
      $region37: #{fir_filter_same.1} parent=35 // pred_check
        %p1381 = pneg %p147
      $region38: #{fir_filter_same.1} parent=35 // pred_check_branch
        %1383 = sbr.rel (%p1381) target = $region40
      $region39: #{fir_filter_same.1} parent=35 // pred_region
        %s1384 = smul.u32 4, %s20
      $region40: #{fir_filter_same.1} parent=35 // pred_fallthru
        _
    $region36: #{fir_filter_same.1} parent=5 // pred_fallthru
      _
    %p1385 = scmp.le.s32.totalorder 2, %s10
    // Predicated region
    $region41: #{fir_filter_same.1} parent=5 // pred_check
      %p1386 = pneg %p1385
    $region42: #{fir_filter_same.1} parent=5 // pred_check_branch
      %1388 = sbr.rel (%p1386) target = $region44
    $region43: #{fir_filter_same.1} parent=5 // pred_region
      %s1389 = ssub.s32 %s10, 2
      // Predicated region
      $region45: #{fir_filter_same.1} parent=43 // pred_check
        %p1390 = pneg %p153
      $region46: #{fir_filter_same.1} parent=43 // pred_check_branch
        %1392 = sbr.rel (%p1390) target = $region48
      $region47: #{fir_filter_same.1} parent=43 // pred_region
        %s1393 = smul.u32 4, %s22
        %p1394 = scmp.lt.s32.totalorder %s21, 0
        %s1395 = scalar_select %p1394, %s21, 0
        %p1396 = scmp.lt.s32.totalorder %s1393, 7
        %s1397 = scalar_select %p1396, %s1393, 7
        %s1398 = smul.addr %s1395, 8
        %s1399 = sadd.s32 %s1397, %s1398
        %s1400 = smul.addr %s1399, 8
        %s1401 = scalar_lea.vmem %s4, %s1400
      $region48: #{fir_filter_same.1} parent=43 // pred_fallthru
        _
    $region44: #{fir_filter_same.1} parent=5 // pred_fallthru
      _
  $region6: #{fir_filter_same.1} parent=0 // loop_footer
    %s14 = sadd.s32 1, %s10
  $region7: #{fir_filter_same.1} parent=0 // loop_footer_branch
    %9 = sbr.rel target = $region3
  $region8: #{fir_filter_same.1} parent=0 // loop_exit
    _

</llo_original>
